<compile_context>
chip_gen: v6e
topology: v6e:2x2x1
jax: 0.10.0
libtpu: 0.0.40
codegen_flags: <defaults>
</compile_context>

<pallas_src>
import functools

import jax
import jax.numpy as jnp
from jax.experimental import pallas as pl
from jax.experimental.pallas import tpu as pltpu

EPS = 1e-5          # BatchNorm2d eps
NEG_SLOPE = 0.01    # LeakyReLU negative_slope
KSIZE = 3           # conv kernel_size
LANES = 128         # TPU lane width

# Flip to True on v6e/v7x for the bf16 MXU path (f32 accumulation preserved).
USE_BF16_MXU = False


def _round_up(c, m):
    return ((c + m - 1) // m) * m


def _pick_tile_h(h, w):
    """Largest H-tile that divides H, keeps rows % 8 == 0, rows <= 512, and
    leaves >= 2 tiles so the grid has enough parallel steps to pipeline and to
    feed both TensorCores on v7x. Falls back to the full H extent."""
    best = h
    for cand in range(1, h):
        rows = cand * w
        if h % cand == 0 and rows % 8 == 0 and rows <= 512 and h // cand >= 2:
            best = cand
    return best


def _conv_bn_lrelu_kernel(xp_ref, w_ref, shift_ref, o_ref, *, th, wdim, cinp):
    """One (batch, H-tile) grid step: 3x3 conv as 9 accumulated matmuls, then
    folded bias/BN shift and LeakyReLU.

    xp_ref    : (H+2, W+2, Cinp)   SAME-padded NHWC image (one batch element)
    w_ref     : (9, Cinp, Coutp)   conv weight with BN scale folded in
    shift_ref : (1, Coutp)         folded conv-bias + BN shift
    o_ref     : (th*W, Coutp)      output rows of this H-tile (lane-dense)
    """
    tw = th * wdim
    h0 = pl.multiple_of(pl.program_id(1) * th, th)

    acc = jnp.zeros((tw, o_ref.shape[-1]), jnp.float32)
    for t in range(KSIZE * KSIZE):
        kh, kw = t // KSIZE, t % KSIZE
        # Shifted (th, W, Cinp) window; the reshape merges leading dims with
        # the lane dim unchanged (layout no-op).
        slab = xp_ref[pl.ds(h0 + kh, th), pl.ds(kw, wdim), :]
        lhs = slab.reshape(tw, cinp).astype(w_ref.dtype)
        acc = acc + jnp.dot(lhs, w_ref[t], preferred_element_type=jnp.float32)

    y = acc + shift_ref[...]                      # conv bias + BN (folded)
    y = jnp.where(y >= 0.0, y, NEG_SLOPE * y)     # LeakyReLU
    o_ref[...] = y.astype(o_ref.dtype)


def conv_dropout_norm_nonlin(x_nhwc_p, params):
    """One ConvDropoutNormNonlin block (eval mode).

    x_nhwc_p : (N, H, W, Cinp) channel-padded NHWC activation.
    Returns    (N, H, W, Coutp) channel-padded NHWC activation."""
    N, H, W, cinp = x_nhwc_p.shape
    w = params["w"]                                   # (3,3,Cin,Cout) HWIO
    cin, cout = w.shape[2], w.shape[3]
    coutp = _round_up(cout, LANES)

    # --- fold conv bias + BatchNorm(eval) into weight scale + shift ---
    scale = params["gamma"] * jax.lax.rsqrt(params["running_var"] + EPS)
    shift = params["beta"] + (params["b"] - params["running_mean"]) * scale
    wf = w * scale                                    # per-Cout scale folded
    wf = jnp.pad(wf, ((0, 0), (0, 0), (0, cinp - cin), (0, coutp - cout)))
    w9 = wf.reshape(KSIZE * KSIZE, cinp, coutp)
    if USE_BF16_MXU:
        w9 = w9.astype(jnp.bfloat16)
    shift_p = jnp.pad(shift, (0, coutp - cout)).reshape(1, coutp)

    # --- SAME spatial padding (only pre-kernel data movement; ~1.3x, not 9x) ---
    xp = jnp.pad(x_nhwc_p, ((0, 0), (1, 1), (1, 1), (0, 0)))

    th = _pick_tile_h(H, W)
    tw = th * W
    kernel = functools.partial(_conv_bn_lrelu_kernel, th=th, wdim=W, cinp=cinp)

    out = pl.pallas_call(
        kernel,
        out_shape=jax.ShapeDtypeStruct((N, H * W, coutp), x_nhwc_p.dtype),
        grid=(N, H // th),
        in_specs=[
            # Whole padded image per batch element; block index is constant
            # along h -> fetched once per n, reused across all H-tiles.
            pl.BlockSpec((None, H + 2, W + 2, cinp), lambda n, h: (n, 0, 0, 0)),
            pl.BlockSpec((KSIZE * KSIZE, cinp, coutp), lambda n, h: (0, 0, 0)),
            pl.BlockSpec((1, coutp), lambda n, h: (0, 0)),
        ],
        out_specs=pl.BlockSpec((None, tw, coutp), lambda n, h: (n, h, 0)),
        compiler_params=pltpu.CompilerParams(
            dimension_semantics=("parallel", "parallel")),
    )(xp, w9, shift_p)
    return out.reshape(N, H, W, coutp)


def stacked_conv_layers(x_nchw, params_list):
    """StackedConvLayers.forward (eval). Input/output are NCHW like PyTorch."""
    x = jnp.transpose(x_nchw, (0, 2, 3, 1))            # NCHW -> NHWC
    cin = x.shape[-1]
    x = jnp.pad(x, ((0, 0), (0, 0), (0, 0), (0, _round_up(cin, LANES) - cin)))
    for p in params_list:
        x = conv_dropout_norm_nonlin(x, p)
    cout = params_list[-1]["w"].shape[-1]
    x = x[..., :cout]                                   # drop channel padding
    return jnp.transpose(x, (0, 3, 1, 2))               # NHWC -> NCHW


def init_stacked_conv_layers(key, in_ch, out_ch, num_convs):
    """Deterministic synthetic init (shapes follow the module's __init__)."""
    params = []
    for i in range(num_convs):
        cin = in_ch if i == 0 else out_ch
        key, k1, k2, k3, k4 = jax.random.split(key, 5)
        fan_in = cin * KSIZE * KSIZE
        bound = 1.0 / (fan_in ** 0.5)
        params.append({
            # stored directly in (kh, kw, Cin, Cout) = HWIO layout
            "w": jax.random.uniform(k1, (KSIZE, KSIZE, cin, out_ch),
                                    jnp.float32, -bound, bound),
            "b": jax.random.uniform(k2, (out_ch,), jnp.float32, -bound, bound),
            "gamma": 1.0 + 0.1 * jax.random.normal(k3, (out_ch,), jnp.float32),
            "beta": 0.1 * jax.random.normal(k4, (out_ch,), jnp.float32),
            "running_mean": jnp.zeros((out_ch,), jnp.float32),
            "running_var": jnp.ones((out_ch,), jnp.float32),
        })
    return params


def _reference_block(x_nhwc, p):
    """Pure-JAX reference for one block (eval mode)."""
    y = jax.lax.conv_general_dilated(
        x_nhwc, p["w"], window_strides=(1, 1), padding="SAME",
        dimension_numbers=("NHWC", "HWIO", "NHWC"),
        precision=jax.lax.Precision.HIGHEST)
    y = y + p["b"]
    y = (y - p["running_mean"]) / jnp.sqrt(p["running_var"] + EPS)
    y = y * p["gamma"] + p["beta"]
    return jnp.where(y >= 0.0, y, NEG_SLOPE * y)


def _reference(x_nchw, params_list):
    x = jnp.transpose(x_nchw, (0, 2, 3, 1))
    for p in params_list:
        x = _reference_block(x, p)
    return jnp.transpose(x, (0, 3, 1, 2))


if __name__ == "__main__":
    # StackedConvLayers(input_feature_channels=4, output_feature_channels=8,
    #                   num_convs=2, first_stride=None)
    N, CIN, COUT, H, W, NUM_CONVS = 2, 4, 8, 16, 16, 2

    key = jax.random.PRNGKey(0)
    kx, kp = jax.random.split(key)
    x = jax.random.normal(kx, (N, CIN, H, W), jnp.float32)
    params = init_stacked_conv_layers(kp, CIN, COUT, NUM_CONVS)

    out = jax.jit(stacked_conv_layers)(x, params)
    out = jax.block_until_ready(out)
    assert out.shape == (N, COUT, H, W), out.shape

    ref = jax.block_until_ready(_reference(x, params))
    assert jnp.allclose(out, ref, rtol=2e-2, atol=2e-2), (
        float(jnp.max(jnp.abs(out - ref))))

    print("KERNEL_OK")
</pallas_src>

<mosaic_0001>
module attributes {stable_mosaic.version = 11 : i64} {
  func.func @_conv_bn_lrelu_kernel(%arg0: i32, %arg1: i32, %arg2: memref<1x18x18x128xf32, #tpu.memory_space<vmem>>, %arg3: memref<9x128x128xf32, #tpu.memory_space<vmem>>, %arg4: memref<1x128xf32, #tpu.memory_space<vmem>>, %arg5: memref<1x128x128xf32, #tpu.memory_space<vmem>>) attributes {dimension_semantics = [#tpu.dimension_semantics<parallel>, #tpu.dimension_semantics<parallel>], iteration_bounds = array<i64: 2, 2>, scalar_prefetch = 0 : i64, scratch_operands = 0 : i64, tpu.core_type = #tpu.core_type<tc>, window_params = [{transform_indices = @transform_0, window_bounds = array<i64: 1, 18, 18, 128>}, {pipeline_mode = #tpu.pipeline_mode<synchronous>, transform_indices = @transform_1, window_bounds = array<i64: 9, 128, 128>}, {pipeline_mode = #tpu.pipeline_mode<synchronous>, transform_indices = @transform_2, window_bounds = array<i64: 1, 128>}, {transform_indices = @transform_3, window_bounds = array<i64: 1, 128, 128>}]} {
    %c8_i32 = arith.constant 8 : i32
    %0 = arith.muli %arg1, %c8_i32 : i32
    %1 = tpu.assume_multiple %0, 8 : i32
    %cst = arith.constant 0.000000e+00 : f32
    %2 = vector.broadcast %cst : f32 to vector<128x128xf32>
    %c0_i32 = arith.constant 0 : i32
    %3 = arith.addi %1, %c0_i32 : i32
    %c0 = arith.constant 0 : index
    %4 = arith.index_cast %3 : i32 to index
    %c0_0 = arith.constant 0 : index
    %c0_1 = arith.constant 0 : index
    %5 = vector.load %arg2[%c0, %4, %c0_0, %c0_1] : memref<1x18x18x128xf32, #tpu.memory_space<vmem>>, vector<1x8x16x128xf32>
    %6 = vector.shape_cast %5 : vector<1x8x16x128xf32> to vector<8x16x128xf32>
    %7 = vector.shape_cast %6 : vector<8x16x128xf32> to vector<128x128xf32>
    %c0_2 = arith.constant 0 : index
    %c0_3 = arith.constant 0 : index
    %c0_4 = arith.constant 0 : index
    %8 = vector.load %arg3[%c0_2, %c0_3, %c0_4] : memref<9x128x128xf32, #tpu.memory_space<vmem>>, vector<1x128x128xf32>
    %9 = vector.shape_cast %8 : vector<1x128x128xf32> to vector<128x128xf32>
    %cst_5 = arith.constant dense<0.000000e+00> : vector<128x128xf32>
    %10 = tpu.matmul %7, %9, %cst_5 {dimension_numbers = #tpu.dot_dimension_numbers<[1], [0], [0], [1], [0, 0, 1, 1], [], []>} : vector<128x128xf32>, vector<128x128xf32>, vector<128x128xf32> -> vector<128x128xf32>
    %11 = arith.addf %2, %10 : vector<128x128xf32>
    %c0_i32_6 = arith.constant 0 : i32
    %12 = arith.addi %1, %c0_i32_6 : i32
    %c0_7 = arith.constant 0 : index
    %13 = arith.index_cast %12 : i32 to index
    %c1 = arith.constant 1 : index
    %c0_8 = arith.constant 0 : index
    %14 = vector.load %arg2[%c0_7, %13, %c1, %c0_8] : memref<1x18x18x128xf32, #tpu.memory_space<vmem>>, vector<1x8x16x128xf32>
    %15 = vector.shape_cast %14 : vector<1x8x16x128xf32> to vector<8x16x128xf32>
    %16 = vector.shape_cast %15 : vector<8x16x128xf32> to vector<128x128xf32>
    %c1_9 = arith.constant 1 : index
    %c0_10 = arith.constant 0 : index
    %c0_11 = arith.constant 0 : index
    %17 = vector.load %arg3[%c1_9, %c0_10, %c0_11] : memref<9x128x128xf32, #tpu.memory_space<vmem>>, vector<1x128x128xf32>
    %18 = vector.shape_cast %17 : vector<1x128x128xf32> to vector<128x128xf32>
    %cst_12 = arith.constant dense<0.000000e+00> : vector<128x128xf32>
    %19 = tpu.matmul %16, %18, %cst_12 {dimension_numbers = #tpu.dot_dimension_numbers<[1], [0], [0], [1], [0, 0, 1, 1], [], []>} : vector<128x128xf32>, vector<128x128xf32>, vector<128x128xf32> -> vector<128x128xf32>
    %20 = arith.addf %11, %19 : vector<128x128xf32>
    %c0_i32_13 = arith.constant 0 : i32
    %21 = arith.addi %1, %c0_i32_13 : i32
    %c0_14 = arith.constant 0 : index
    %22 = arith.index_cast %21 : i32 to index
    %c2 = arith.constant 2 : index
    %c0_15 = arith.constant 0 : index
    %23 = vector.load %arg2[%c0_14, %22, %c2, %c0_15] : memref<1x18x18x128xf32, #tpu.memory_space<vmem>>, vector<1x8x16x128xf32>
    %24 = vector.shape_cast %23 : vector<1x8x16x128xf32> to vector<8x16x128xf32>
    %25 = vector.shape_cast %24 : vector<8x16x128xf32> to vector<128x128xf32>
    %c2_16 = arith.constant 2 : index
    %c0_17 = arith.constant 0 : index
    %c0_18 = arith.constant 0 : index
    %26 = vector.load %arg3[%c2_16, %c0_17, %c0_18] : memref<9x128x128xf32, #tpu.memory_space<vmem>>, vector<1x128x128xf32>
    %27 = vector.shape_cast %26 : vector<1x128x128xf32> to vector<128x128xf32>
    %cst_19 = arith.constant dense<0.000000e+00> : vector<128x128xf32>
    %28 = tpu.matmul %25, %27, %cst_19 {dimension_numbers = #tpu.dot_dimension_numbers<[1], [0], [0], [1], [0, 0, 1, 1], [], []>} : vector<128x128xf32>, vector<128x128xf32>, vector<128x128xf32> -> vector<128x128xf32>
    %29 = arith.addf %20, %28 : vector<128x128xf32>
    %c1_i32 = arith.constant 1 : i32
    %30 = arith.addi %1, %c1_i32 : i32
    %c0_20 = arith.constant 0 : index
    %31 = arith.index_cast %30 : i32 to index
    %c0_21 = arith.constant 0 : index
    %c0_22 = arith.constant 0 : index
    %32 = vector.load %arg2[%c0_20, %31, %c0_21, %c0_22] : memref<1x18x18x128xf32, #tpu.memory_space<vmem>>, vector<1x8x16x128xf32>
    %33 = vector.shape_cast %32 : vector<1x8x16x128xf32> to vector<8x16x128xf32>
    %34 = vector.shape_cast %33 : vector<8x16x128xf32> to vector<128x128xf32>
    %c3 = arith.constant 3 : index
    %c0_23 = arith.constant 0 : index
    %c0_24 = arith.constant 0 : index
    %35 = vector.load %arg3[%c3, %c0_23, %c0_24] : memref<9x128x128xf32, #tpu.memory_space<vmem>>, vector<1x128x128xf32>
    %36 = vector.shape_cast %35 : vector<1x128x128xf32> to vector<128x128xf32>
    %cst_25 = arith.constant dense<0.000000e+00> : vector<128x128xf32>
    %37 = tpu.matmul %34, %36, %cst_25 {dimension_numbers = #tpu.dot_dimension_numbers<[1], [0], [0], [1], [0, 0, 1, 1], [], []>} : vector<128x128xf32>, vector<128x128xf32>, vector<128x128xf32> -> vector<128x128xf32>
    %38 = arith.addf %29, %37 : vector<128x128xf32>
    %c1_i32_26 = arith.constant 1 : i32
    %39 = arith.addi %1, %c1_i32_26 : i32
    %c0_27 = arith.constant 0 : index
    %40 = arith.index_cast %39 : i32 to index
    %c1_28 = arith.constant 1 : index
    %c0_29 = arith.constant 0 : index
    %41 = vector.load %arg2[%c0_27, %40, %c1_28, %c0_29] : memref<1x18x18x128xf32, #tpu.memory_space<vmem>>, vector<1x8x16x128xf32>
    %42 = vector.shape_cast %41 : vector<1x8x16x128xf32> to vector<8x16x128xf32>
    %43 = vector.shape_cast %42 : vector<8x16x128xf32> to vector<128x128xf32>
    %c4 = arith.constant 4 : index
    %c0_30 = arith.constant 0 : index
    %c0_31 = arith.constant 0 : index
    %44 = vector.load %arg3[%c4, %c0_30, %c0_31] : memref<9x128x128xf32, #tpu.memory_space<vmem>>, vector<1x128x128xf32>
    %45 = vector.shape_cast %44 : vector<1x128x128xf32> to vector<128x128xf32>
    %cst_32 = arith.constant dense<0.000000e+00> : vector<128x128xf32>
    %46 = tpu.matmul %43, %45, %cst_32 {dimension_numbers = #tpu.dot_dimension_numbers<[1], [0], [0], [1], [0, 0, 1, 1], [], []>} : vector<128x128xf32>, vector<128x128xf32>, vector<128x128xf32> -> vector<128x128xf32>
    %47 = arith.addf %38, %46 : vector<128x128xf32>
    %c1_i32_33 = arith.constant 1 : i32
    %48 = arith.addi %1, %c1_i32_33 : i32
    %c0_34 = arith.constant 0 : index
    %49 = arith.index_cast %48 : i32 to index
    %c2_35 = arith.constant 2 : index
    %c0_36 = arith.constant 0 : index
    %50 = vector.load %arg2[%c0_34, %49, %c2_35, %c0_36] : memref<1x18x18x128xf32, #tpu.memory_space<vmem>>, vector<1x8x16x128xf32>
    %51 = vector.shape_cast %50 : vector<1x8x16x128xf32> to vector<8x16x128xf32>
    %52 = vector.shape_cast %51 : vector<8x16x128xf32> to vector<128x128xf32>
    %c5 = arith.constant 5 : index
    %c0_37 = arith.constant 0 : index
    %c0_38 = arith.constant 0 : index
    %53 = vector.load %arg3[%c5, %c0_37, %c0_38] : memref<9x128x128xf32, #tpu.memory_space<vmem>>, vector<1x128x128xf32>
    %54 = vector.shape_cast %53 : vector<1x128x128xf32> to vector<128x128xf32>
    %cst_39 = arith.constant dense<0.000000e+00> : vector<128x128xf32>
    %55 = tpu.matmul %52, %54, %cst_39 {dimension_numbers = #tpu.dot_dimension_numbers<[1], [0], [0], [1], [0, 0, 1, 1], [], []>} : vector<128x128xf32>, vector<128x128xf32>, vector<128x128xf32> -> vector<128x128xf32>
    %56 = arith.addf %47, %55 : vector<128x128xf32>
    %c2_i32 = arith.constant 2 : i32
    %57 = arith.addi %1, %c2_i32 : i32
    %c0_40 = arith.constant 0 : index
    %58 = arith.index_cast %57 : i32 to index
    %c0_41 = arith.constant 0 : index
    %c0_42 = arith.constant 0 : index
    %59 = vector.load %arg2[%c0_40, %58, %c0_41, %c0_42] : memref<1x18x18x128xf32, #tpu.memory_space<vmem>>, vector<1x8x16x128xf32>
    %60 = vector.shape_cast %59 : vector<1x8x16x128xf32> to vector<8x16x128xf32>
    %61 = vector.shape_cast %60 : vector<8x16x128xf32> to vector<128x128xf32>
    %c6 = arith.constant 6 : index
    %c0_43 = arith.constant 0 : index
    %c0_44 = arith.constant 0 : index
    %62 = vector.load %arg3[%c6, %c0_43, %c0_44] : memref<9x128x128xf32, #tpu.memory_space<vmem>>, vector<1x128x128xf32>
    %63 = vector.shape_cast %62 : vector<1x128x128xf32> to vector<128x128xf32>
    %cst_45 = arith.constant dense<0.000000e+00> : vector<128x128xf32>
    %64 = tpu.matmul %61, %63, %cst_45 {dimension_numbers = #tpu.dot_dimension_numbers<[1], [0], [0], [1], [0, 0, 1, 1], [], []>} : vector<128x128xf32>, vector<128x128xf32>, vector<128x128xf32> -> vector<128x128xf32>
    %65 = arith.addf %56, %64 : vector<128x128xf32>
    %c2_i32_46 = arith.constant 2 : i32
    %66 = arith.addi %1, %c2_i32_46 : i32
    %c0_47 = arith.constant 0 : index
    %67 = arith.index_cast %66 : i32 to index
    %c1_48 = arith.constant 1 : index
    %c0_49 = arith.constant 0 : index
    %68 = vector.load %arg2[%c0_47, %67, %c1_48, %c0_49] : memref<1x18x18x128xf32, #tpu.memory_space<vmem>>, vector<1x8x16x128xf32>
    %69 = vector.shape_cast %68 : vector<1x8x16x128xf32> to vector<8x16x128xf32>
    %70 = vector.shape_cast %69 : vector<8x16x128xf32> to vector<128x128xf32>
    %c7 = arith.constant 7 : index
    %c0_50 = arith.constant 0 : index
    %c0_51 = arith.constant 0 : index
    %71 = vector.load %arg3[%c7, %c0_50, %c0_51] : memref<9x128x128xf32, #tpu.memory_space<vmem>>, vector<1x128x128xf32>
    %72 = vector.shape_cast %71 : vector<1x128x128xf32> to vector<128x128xf32>
    %cst_52 = arith.constant dense<0.000000e+00> : vector<128x128xf32>
    %73 = tpu.matmul %70, %72, %cst_52 {dimension_numbers = #tpu.dot_dimension_numbers<[1], [0], [0], [1], [0, 0, 1, 1], [], []>} : vector<128x128xf32>, vector<128x128xf32>, vector<128x128xf32> -> vector<128x128xf32>
    %74 = arith.addf %65, %73 : vector<128x128xf32>
    %c2_i32_53 = arith.constant 2 : i32
    %75 = arith.addi %1, %c2_i32_53 : i32
    %c0_54 = arith.constant 0 : index
    %76 = arith.index_cast %75 : i32 to index
    %c2_55 = arith.constant 2 : index
    %c0_56 = arith.constant 0 : index
    %77 = vector.load %arg2[%c0_54, %76, %c2_55, %c0_56] : memref<1x18x18x128xf32, #tpu.memory_space<vmem>>, vector<1x8x16x128xf32>
    %78 = vector.shape_cast %77 : vector<1x8x16x128xf32> to vector<8x16x128xf32>
    %79 = vector.shape_cast %78 : vector<8x16x128xf32> to vector<128x128xf32>
    %c8 = arith.constant 8 : index
    %c0_57 = arith.constant 0 : index
    %c0_58 = arith.constant 0 : index
    %80 = vector.load %arg3[%c8, %c0_57, %c0_58] : memref<9x128x128xf32, #tpu.memory_space<vmem>>, vector<1x128x128xf32>
    %81 = vector.shape_cast %80 : vector<1x128x128xf32> to vector<128x128xf32>
    %cst_59 = arith.constant dense<0.000000e+00> : vector<128x128xf32>
    %82 = tpu.matmul %79, %81, %cst_59 {dimension_numbers = #tpu.dot_dimension_numbers<[1], [0], [0], [1], [0, 0, 1, 1], [], []>} : vector<128x128xf32>, vector<128x128xf32>, vector<128x128xf32> -> vector<128x128xf32>
    %83 = arith.addf %74, %82 : vector<128x128xf32>
    %c0_60 = arith.constant 0 : index
    %c0_61 = arith.constant 0 : index
    %84 = vector.load %arg4[%c0_60, %c0_61] : memref<1x128xf32, #tpu.memory_space<vmem>>, vector<1x128xf32>
    %85 = vector.broadcast %84 : vector<1x128xf32> to vector<128x128xf32>
    %86 = arith.addf %83, %85 : vector<128x128xf32>
    %cst_62 = arith.constant 0.000000e+00 : f32
    %87 = vector.broadcast %cst_62 : f32 to vector<128x128xf32>
    %88 = arith.cmpf oge, %86, %87 : vector<128x128xf32>
    %cst_63 = arith.constant 0.00999999977 : f32
    %89 = vector.broadcast %cst_63 : f32 to vector<128x128xf32>
    %90 = arith.mulf %89, %86 : vector<128x128xf32>
    %91 = arith.select %88, %86, %90 : vector<128x128xi1>, vector<128x128xf32>
    %c0_64 = arith.constant 0 : index
    %c0_65 = arith.constant 0 : index
    %c0_66 = arith.constant 0 : index
    %92 = vector.load %arg5[%c0_64, %c0_65, %c0_66] : memref<1x128x128xf32, #tpu.memory_space<vmem>>, vector<1x128x128xf32>
    %93 = vector.shape_cast %92 : vector<1x128x128xf32> to vector<128x128xf32>
    %94 = vector.shape_cast %91 : vector<128x128xf32> to vector<1x128x128xf32>
    tpu.vector_store %arg5[%c0_64, %c0_65, %c0_66], %94 {strides = array<i32>} : memref<1x128x128xf32, #tpu.memory_space<vmem>>, vector<1x128x128xf32>,
    return
  }
  func.func @transform_0(%arg0: i32, %arg1: i32) -> (i32, i32, i32, i32) {
    %c0_i32 = arith.constant 0 : i32
    %c0_i32_0 = arith.constant 0 : i32
    %c0_i32_1 = arith.constant 0 : i32
    %c0_i32_2 = arith.constant 0 : i32
    return %arg0, %c0_i32, %c0_i32_0, %c0_i32_1 : i32, i32, i32, i32
  }
  func.func @transform_1(%arg0: i32, %arg1: i32) -> (i32, i32, i32) {
    %c0_i32 = arith.constant 0 : i32
    %c0_i32_0 = arith.constant 0 : i32
    %c0_i32_1 = arith.constant 0 : i32
    %c0_i32_2 = arith.constant 0 : i32
    return %c0_i32, %c0_i32_0, %c0_i32_1 : i32, i32, i32
  }
  func.func @transform_2(%arg0: i32, %arg1: i32) -> (i32, i32) {
    %c0_i32 = arith.constant 0 : i32
    %c0_i32_0 = arith.constant 0 : i32
    %c0_i32_1 = arith.constant 0 : i32
    return %c0_i32, %c0_i32_0 : i32, i32
  }
  func.func @transform_3(%arg0: i32, %arg1: i32) -> (i32, i32, i32) {
    %c0_i32 = arith.constant 0 : i32
    %c0_i32_0 = arith.constant 0 : i32
    return %arg0, %arg1, %c0_i32 : i32, i32, i32
  }
}

</mosaic_0001>

<llo_original>
// kernel: stacked_conv_layers.2
$region0: #{stacked_conv_layers.2}
  #allocation0 [shape = 'u32[]', space=smem, size = 0x4, offset = 0x4, fixed_abs, tag = 'smem constant byte address 0x4 - core index']
  #allocation1 [shape = 'u32[144,128]{1,0:T(1,128)}', space=vmem, size = 0x12000, scoped, tag = 'internal scratch']
  %s0 = inlined_call_operand.vmem [shape: f32[2,18,18,128], index: 0, kind: input, shape index: {}]
  %s1 = inlined_call_operand.vmem [shape: f32[9,128,128], index: 1, kind: input, shape index: {}]
  %s2 = inlined_call_operand.vmem [shape: f32[1,128], index: 2, kind: input, shape index: {}]
  %s3 = inlined_call_operand.vmem [shape: f32[2,256,128], index: 3, kind: output, shape index: {}]
  %s4 = sld [smem:[#allocation0]]
  $region45: #{stacked_conv_layers.2} parent=0
    _
  %s6 = ssub.s32 1, %s4
  %s7 = scalar_select 0, %s6, %s4
  loop: start=0, step=1, limit=6
  $region2: #{stacked_conv_layers.2} parent=0 // loop_pre_header
    _
  $region3: #{stacked_conv_layers.2} parent=0 // loop_header
    %s9 = sphi 0, %s13
    %p10 = scmp.ge.s32.totalorder %s9, 6
    %s16 = sphi 0, %s28
    %s17 = sphi 0, %s24
    %s18 = sphi 0, %s16
    %s19 = sphi 0, %s17
    %s20 = sphi 0, %s18
    %s21 = sphi 0, %s19
    %s31 = sphi 0, %s33
    %s34 = sphi 0, %s31
    %s35 = sphi 0, %s34
    %s51 = sphi 0, %s35
    %s55 = sphi 0, %s55
    %s57 = sphi 0, %s55
    %s58 = sphi 0, %s57
    %s72 = sphi 0, %s58
    %s76 = sphi 0, %s76
    %s78 = sphi 0, %s76
    %s79 = sphi 0, %s78
    %s93 = sphi 0, %s79
    %s101 = sphi 0, %s103
    %s104 = sphi 0, %s101
    %s105 = sphi 0, %s104
    %s121 = sphi 0, %s105
  $region4: #{stacked_conv_layers.2} parent=0 // loop_header_branch
    %12 = sbr.rel (%p10) target = $region8
  $region5: #{stacked_conv_layers.2} parent=0 // loop_body
    %s14 = ssub.s32 %s9, 1
    %s15 = ssub.s32 %s9, 2
    %s22 = sadd.s32 1, %s17
    %p23 = scmp.ge.s32.totalorder %s22, 2
    %s24 = scalar_select %p23, 0, %s22
    %s25 = sadd.s32 1, %s16
    %s26 = scalar_select %p23, %s25, %s16
    %p27 = scmp.ge.s32.totalorder %s26, 2
    %s28 = scalar_select %p27, 0, %s26
    %s29 = ssub.s32 %s16, %s28
    %p30 = scmp.eq.s32.totalorder %s29, 0
    %s32 = sadd.s32 %s31, 1
    %s33 = scalar_select %p30, %s31, %s32
    %p36 = pneg %p30
    %p37 = scmp.eq.s32.totalorder %s9, 3
    %p38 = por %p36, %p37
    %p39 = scmp.ne.s32.totalorder %s31, %s34
    %p40 = scmp.eq.s32.totalorder %s9, 0
    %p41 = por %p39, %p40
    %p42 = scmp.ne.s32.totalorder %s31, %s34
    %p43 = scmp.eq.s32.totalorder %s14, 3
    %p44 = por %p42, %p43
    %p45 = scmp.ne.s32.totalorder %s34, %s35
    %p46 = scmp.eq.s32.totalorder %s14, 0
    %p47 = por %p45, %p46
    %p48 = scmp.ne.s32.totalorder %s34, %s35
    %p49 = scmp.eq.s32.totalorder %s15, 3
    %p50 = por %p48, %p49
    %p52 = scmp.ne.s32.totalorder %s35, %s51
    %p53 = scmp.eq.s32.totalorder %s15, 0
    %p54 = por %p52, %p53
    %s56 = sadd.s32 %s55, 1
    %p59 = scmp.eq.s32.totalorder %s9, 3
    %p60 = scmp.ne.s32.totalorder %s55, %s57
    %p61 = scmp.eq.s32.totalorder %s9, 0
    %p62 = por %p60, %p61
    %p63 = scmp.ne.s32.totalorder %s55, %s57
    %p64 = scmp.eq.s32.totalorder %s14, 3
    %p65 = por %p63, %p64
    %p66 = scmp.ne.s32.totalorder %s57, %s58
    %p67 = scmp.eq.s32.totalorder %s14, 0
    %p68 = por %p66, %p67
    %p69 = scmp.ne.s32.totalorder %s57, %s58
    %p70 = scmp.eq.s32.totalorder %s15, 3
    %p71 = por %p69, %p70
    %p73 = scmp.ne.s32.totalorder %s58, %s72
    %p74 = scmp.eq.s32.totalorder %s15, 0
    %p75 = por %p73, %p74
    %s77 = sadd.s32 %s76, 1
    %p80 = scmp.eq.s32.totalorder %s9, 3
    %p81 = scmp.ne.s32.totalorder %s76, %s78
    %p82 = scmp.eq.s32.totalorder %s9, 0
    %p83 = por %p81, %p82
    %p84 = scmp.ne.s32.totalorder %s76, %s78
    %p85 = scmp.eq.s32.totalorder %s14, 3
    %p86 = por %p84, %p85
    %p87 = scmp.ne.s32.totalorder %s78, %s79
    %p88 = scmp.eq.s32.totalorder %s14, 0
    %p89 = por %p87, %p88
    %p90 = scmp.ne.s32.totalorder %s78, %s79
    %p91 = scmp.eq.s32.totalorder %s15, 3
    %p92 = por %p90, %p91
    %p94 = scmp.ne.s32.totalorder %s79, %s93
    %p95 = scmp.eq.s32.totalorder %s15, 0
    %p96 = por %p94, %p95
    %s97 = ssub.s32 %s16, %s28
    %s98 = ssub.s32 %s17, %s24
    %s99 = sor.u32 %s97, %s98
    %p100 = scmp.eq.s32.totalorder %s99, 0
    %s102 = sadd.s32 %s101, 1
    %s103 = scalar_select %p100, %s101, %s102
    %p106 = pneg %p100
    %p107 = scmp.eq.s32.totalorder %s9, 3
    %p108 = por %p106, %p107
    %p109 = scmp.ne.s32.totalorder %s101, %s104
    %p110 = scmp.eq.s32.totalorder %s9, 0
    %p111 = por %p109, %p110
    %p112 = scmp.ne.s32.totalorder %s101, %s104
    %p113 = scmp.eq.s32.totalorder %s14, 3
    %p114 = por %p112, %p113
    %p115 = scmp.ne.s32.totalorder %s104, %s105
    %p116 = scmp.eq.s32.totalorder %s14, 0
    %p117 = por %p115, %p116
    %p118 = scmp.ne.s32.totalorder %s104, %s105
    %p119 = scmp.eq.s32.totalorder %s15, 3
    %p120 = por %p118, %p119
    %p122 = scmp.ne.s32.totalorder %s105, %s121
    %p123 = scmp.eq.s32.totalorder %s15, 0
    %p124 = por %p122, %p123
    %p125 = scmp.le.s32.totalorder 1, %s9
    %p126 = scmp.lt.s32.totalorder %s9, 5
    %p127 = pnand %p125, %p126
    %p128 = pneg %p127
    // Predicated region
    $region9: #{stacked_conv_layers.2} parent=5 // pred_check
      _
    $region10: #{stacked_conv_layers.2} parent=5 // pred_check_branch
      %130 = sbr.rel (%p127) target = $region12
    $region11: #{stacked_conv_layers.2} parent=5 // pred_region
      %s131 = ssub.s32 %s9, 1
      // Predicated region
      $region13: #{stacked_conv_layers.2} parent=11 // pred_check
        %p132 = pneg %p68
      $region14: #{stacked_conv_layers.2} parent=11 // pred_check_branch
        %134 = sbr.rel (%p132) target = $region16
      $region15: #{stacked_conv_layers.2} parent=11 // pred_region
        _
      $region16: #{stacked_conv_layers.2} parent=11 // pred_fallthru
        _
      // Predicated region
      $region17: #{stacked_conv_layers.2} parent=11 // pred_check
        %p135 = pneg %p89
      $region18: #{stacked_conv_layers.2} parent=11 // pred_check_branch
        %137 = sbr.rel (%p135) target = $region20
      $region19: #{stacked_conv_layers.2} parent=11 // pred_region
        _
      $region20: #{stacked_conv_layers.2} parent=11 // pred_fallthru
        _
    $region12: #{stacked_conv_layers.2} parent=5 // pred_fallthru
      _
    %p138 = scmp.lt.s32.totalorder %s9, 4
    // Predicated region
    $region21: #{stacked_conv_layers.2} parent=5 // pred_check
      %p139 = pneg %p138
    $region22: #{stacked_conv_layers.2} parent=5 // pred_check_branch
      %141 = sbr.rel (%p139) target = $region24
    $region23: #{stacked_conv_layers.2} parent=5 // pred_region
      // Predicated region
      $region25: #{stacked_conv_layers.2} parent=23 // pred_check
        %p142 = pneg %p41
      $region26: #{stacked_conv_layers.2} parent=23 // pred_check_branch
        %144 = sbr.rel (%p142) target = $region28
      $region27: #{stacked_conv_layers.2} parent=23 // pred_region
        %p145 = scmp.lt.s32.totalorder %s16, 1
        %s146 = scalar_select %p145, %s16, 1
        %s147 = smul.addr %s146, 54
        %s148 = smul.addr %s147, 8
        %s149 = scalar_lea.vmem %s0, %s148
      $region28: #{stacked_conv_layers.2} parent=23 // pred_fallthru
        _
    $region24: #{stacked_conv_layers.2} parent=5 // pred_fallthru
      _
    %p150 = scmp.le.s32.totalorder 1, %s9
    %p151 = scmp.lt.s32.totalorder %s9, 5
    %p152 = pnand %p150, %p151
    %p153 = pneg %p152
    // Predicated region
    $region29: #{stacked_conv_layers.2} parent=5 // pred_check
      _
    $region30: #{stacked_conv_layers.2} parent=5 // pred_check_branch
      %155 = sbr.rel (%p152) target = $region32
    $region31: #{stacked_conv_layers.2} parent=5 // pred_region
      %s156 = ssub.s32 %s9, 1
      %p157 = scmp.lt.s32.totalorder %s18, 1
      %s158 = scalar_select %p157, %s18, 1
      %s159 = smul.addr %s158, 54
      %s160 = smul.addr %s159, 8
      %s161 = scalar_lea.vmem %s0, %s160
      %p162 = pneg %p47
      %p163 = pneg %p44
      %p164 = pneg %p68
      %p165 = pneg %p65
      %p166 = pneg %p89
      %p167 = pneg %p86
      %p168 = pneg %p117
      %p169 = pneg %p114
      %s170 = smul.u32 16, %s19
      %p171 = scmp.lt.s32.totalorder %s18, 1
      %s172 = scalar_select %p171, %s18, 1
      %p173 = scmp.lt.s32.totalorder %s170, 31
      %s174 = scalar_select %p173, %s170, 31
      %s175 = smul.addr %s172, 32
      %s176 = sadd.s32 %s174, %s175
      %s177 = smul.addr %s176, 8
      %s178 = scalar_lea.vmem %s3, %s177
      %p179 = scmp.lt.s32.totalorder %s18, 1
      %s180 = scalar_select %p179, %s18, 1
      %s181 = smul.addr %s180, 54
      %s182 = smul.addr %s181, 8
      %s183 = scalar_lea.vmem %s0, %s182
      %s184 = smul.u32 16, %s19
      %p185 = scmp.lt.s32.totalorder %s18, 1
      %s186 = scalar_select %p185, %s18, 1
      %p187 = scmp.lt.s32.totalorder %s184, 31
      %s188 = scalar_select %p187, %s184, 31
      %s189 = smul.addr %s186, 32
      %s190 = sadd.s32 %s188, %s189
      %s191 = smul.addr %s190, 8
      %s192 = scalar_lea.vmem %s3, %s191
      %s193 = smul.u32 16, %s19
      %s194 = smul.u32 %s19, 8
      %s195 = smul.u32 %s194, 24
      %s196 = scalar_lea.vmem %s183, %s195
      %v197 = vld [vmem:[%s196] sm:$0xff]
      %v198 = vld [vmem:[%s196 + $0x8] sm:$0xff]
      %v199 = vld [vmem:[%s196 + $0x18] sm:$0xff]
      %v200 = vld [vmem:[%s196 + $0x20] sm:$0xff]
      %v201 = vld [vmem:[%s196 + $0x30] sm:$0xff]
      %v202 = vld [vmem:[%s196 + $0x38] sm:$0xff]
      %v203 = vld [vmem:[%s196 + $0x48] sm:$0xff]
      %v204 = vld [vmem:[%s196 + $0x50] sm:$0xff]
      %v205 = vld [vmem:[%s196 + $0x60] sm:$0xff]
      %v206 = vld [vmem:[%s196 + $0x68] sm:$0xff]
      %v207 = vld [vmem:[%s196 + $0x78] sm:$0xff]
      %v208 = vld [vmem:[%s196 + $0x80] sm:$0xff]
      %v209 = vld [vmem:[%s196 + $0x90] sm:$0xff]
      %v210 = vld [vmem:[%s196 + $0x98] sm:$0xff]
      %v211 = vld [vmem:[%s196 + $0xa8] sm:$0xff]
      %v212 = vld [vmem:[%s196 + $0xb0] sm:$0xff]
      %v213 = vld [vmem:[%s1] sm:$0xff]
      %v214 = vld [vmem:[%s1 + $0x8] sm:$0xff]
      %v215 = vld [vmem:[%s1 + $0x10] sm:$0xff]
      %v216 = vld [vmem:[%s1 + $0x18] sm:$0xff]
      %v217 = vld [vmem:[%s1 + $0x20] sm:$0xff]
      %v218 = vld [vmem:[%s1 + $0x28] sm:$0xff]
      %v219 = vld [vmem:[%s1 + $0x30] sm:$0xff]
      %v220 = vld [vmem:[%s1 + $0x38] sm:$0xff]
      %v221 = vld [vmem:[%s1 + $0x40] sm:$0xff]
      %v222 = vld [vmem:[%s1 + $0x48] sm:$0xff]
      %v223 = vld [vmem:[%s1 + $0x50] sm:$0xff]
      %v224 = vld [vmem:[%s1 + $0x58] sm:$0xff]
      %v225 = vld [vmem:[%s1 + $0x60] sm:$0xff]
      %v226 = vld [vmem:[%s1 + $0x68] sm:$0xff]
      %v227 = vld [vmem:[%s1 + $0x70] sm:$0xff]
      %v228 = vld [vmem:[%s1 + $0x78] sm:$0xff]
      %v229 = vld [vmem:[%s196 + $0x1] sm:$0xff]
      %v230 = vld [vmem:[%s196 + $0x9] sm:$0xff]
      %v231 = vld [vmem:[%s196 + $0x19] sm:$0xff]
      %v232 = vld [vmem:[%s196 + $0x21] sm:$0xff]
      %v233 = vld [vmem:[%s196 + $0x31] sm:$0xff]
      %v234 = vld [vmem:[%s196 + $0x39] sm:$0xff]
      %v235 = vld [vmem:[%s196 + $0x49] sm:$0xff]
      %v236 = vld [vmem:[%s196 + $0x51] sm:$0xff]
      %v237 = vld [vmem:[%s196 + $0x61] sm:$0xff]
      %v238 = vld [vmem:[%s196 + $0x69] sm:$0xff]
      %v239 = vld [vmem:[%s196 + $0x79] sm:$0xff]
      %v240 = vld [vmem:[%s196 + $0x81] sm:$0xff]
      %v241 = vld [vmem:[%s196 + $0x91] sm:$0xff]
      %v242 = vld [vmem:[%s196 + $0x99] sm:$0xff]
      %v243 = vld [vmem:[%s196 + $0xa9] sm:$0xff]
      %v244 = vld [vmem:[%s196 + $0xb1] sm:$0xff]
      %s245 = scalar_lea.vmem %s1, 128
      %v246 = vld [vmem:[%s245] sm:$0xff]
      %v247 = vld [vmem:[%s245 + $0x8] sm:$0xff]
      %v248 = vld [vmem:[%s245 + $0x10] sm:$0xff]
      %v249 = vld [vmem:[%s245 + $0x18] sm:$0xff]
      %v250 = vld [vmem:[%s245 + $0x20] sm:$0xff]
      %v251 = vld [vmem:[%s245 + $0x28] sm:$0xff]
      %v252 = vld [vmem:[%s245 + $0x30] sm:$0xff]
      %v253 = vld [vmem:[%s245 + $0x38] sm:$0xff]
      %v254 = vld [vmem:[%s245 + $0x40] sm:$0xff]
      %v255 = vld [vmem:[%s245 + $0x48] sm:$0xff]
      %v256 = vld [vmem:[%s245 + $0x50] sm:$0xff]
      %v257 = vld [vmem:[%s245 + $0x58] sm:$0xff]
      %v258 = vld [vmem:[%s245 + $0x60] sm:$0xff]
      %v259 = vld [vmem:[%s245 + $0x68] sm:$0xff]
      %v260 = vld [vmem:[%s245 + $0x70] sm:$0xff]
      %v261 = vld [vmem:[%s245 + $0x78] sm:$0xff]
      %262 = vmatprep.subr.mxu0 0.0
      %263 = vmatpush1.msra.mxu0 %v261
      %264 = vmatprep.subr.mxu0 0.0
      %265 = vmatpush1.msra.mxu0 %v260
      %266 = vmatprep.subr.mxu0 0.0
      %267 = vmatpush1.msra.mxu0 %v259
      %268 = vmatprep.subr.mxu0 0.0
      %269 = vmatpush1.msra.mxu0 %v258
      %270 = vmatprep.subr.mxu0 0.0
      %271 = vmatpush1.msra.mxu0 %v257
      %272 = vmatprep.subr.mxu0 0.0
      %273 = vmatpush1.msra.mxu0 %v256
      %274 = vmatprep.subr.mxu0 0.0
      %275 = vmatpush1.msra.mxu0 %v255
      %276 = vmatprep.subr.mxu0 0.0
      %277 = vmatpush1.msra.mxu0 %v254
      %278 = vmatprep.subr.mxu0 0.0
      %279 = vmatpush1.msra.mxu0 %v253
      %280 = vmatprep.subr.mxu0 0.0
      %281 = vmatpush1.msra.mxu0 %v252
      %282 = vmatprep.subr.mxu0 0.0
      %283 = vmatpush1.msra.mxu0 %v251
      %284 = vmatprep.subr.mxu0 0.0
      %285 = vmatpush1.msra.mxu0 %v250
      %286 = vmatprep.subr.mxu0 0.0
      %287 = vmatpush1.msra.mxu0 %v249
      %288 = vmatprep.subr.mxu0 0.0
      %289 = vmatpush1.msra.mxu0 %v248
      %290 = vmatprep.subr.mxu0 0.0
      %291 = vmatpush1.msra.mxu0 %v247
      %292 = vmatprep.subr.mxu0 0.0
      %293 = vmatpush1.msra.mxu0 %v246
      %294 = vmatprep.subr.mxu0 0.0
      %295 = vmatpush2.msra.mxu0 0.0
      %296 = vmatprep.subr.mxu0 0.0
      %297 = vmatpush2.msra.mxu0 0.0
      %298 = vmatprep.subr.mxu0 0.0
      %299 = vmatpush2.msra.mxu0 0.0
      %300 = vmatprep.subr.mxu0 0.0
      %301 = vmatpush2.msra.mxu0 0.0
      %302 = vmatprep.subr.mxu0 0.0
      %303 = vmatpush2.msra.mxu0 0.0
      %304 = vmatprep.subr.mxu0 0.0
      %305 = vmatpush2.msra.mxu0 0.0
      %306 = vmatprep.subr.mxu0 0.0
      %307 = vmatpush2.msra.mxu0 0.0
      %308 = vmatprep.subr.mxu0 0.0
      %309 = vmatpush2.msra.mxu0 0.0
      %310 = vmatprep.subr.mxu0 0.0
      %311 = vmatpush2.msra.mxu0 0.0
      %312 = vmatprep.subr.mxu0 0.0
      %313 = vmatpush2.msra.mxu0 0.0
      %314 = vmatprep.subr.mxu0 0.0
      %315 = vmatpush2.msra.mxu0 0.0
      %316 = vmatprep.subr.mxu0 0.0
      %317 = vmatpush2.msra.mxu0 0.0
      %318 = vmatprep.subr.mxu0 0.0
      %319 = vmatpush2.msra.mxu0 0.0
      %320 = vmatprep.subr.mxu0 0.0
      %321 = vmatpush2.msra.mxu0 0.0
      %322 = vmatprep.subr.mxu0 0.0
      %323 = vmatpush2.msra.mxu0 0.0
      %324 = vmatprep.subr.mxu0 0.0
      %325 = vmatpush2.msra.mxu0 0.0
      %326 = vmatprep.mubr.f32.mxu0 0.0
      %327 = vmatmul.mubr.f32.gmra.mxu0 %v229
      %v328 = vpop.f32.mrf.mxu0
      %v329 = vadd.f32 0.0, %v328
      %v330 = vpop.f32.mrf.mxu0
      %331 = vmatprep.mubr.f32.mxu0 0.0
      %332 = vmatmul.mubr.f32.gmra.mxu0 %v230
      %v333 = vpop.f32.mrf.mxu0
      %v334 = vadd.f32 0.0, %v333
      %v335 = vpop.f32.mrf.mxu0
      %336 = vmatprep.mubr.f32.mxu0 0.0
      %337 = vmatmul.mubr.f32.gmra.mxu0 %v231
      %v338 = vpop.f32.mrf.mxu0
      %v339 = vadd.f32 0.0, %v338
      %v340 = vpop.f32.mrf.mxu0
      %341 = vmatprep.mubr.f32.mxu0 0.0
      %342 = vmatmul.mubr.f32.gmra.mxu0 %v232
      %v343 = vpop.f32.mrf.mxu0
      %v344 = vadd.f32 0.0, %v343
      %v345 = vpop.f32.mrf.mxu0
      %346 = vmatprep.mubr.f32.mxu0 0.0
      %347 = vmatmul.mubr.f32.gmra.mxu0 %v233
      %v348 = vpop.f32.mrf.mxu0
      %v349 = vadd.f32 0.0, %v348
      %v350 = vpop.f32.mrf.mxu0
      %351 = vmatprep.mubr.f32.mxu0 0.0
      %352 = vmatmul.mubr.f32.gmra.mxu0 %v234
      %v353 = vpop.f32.mrf.mxu0
      %v354 = vadd.f32 0.0, %v353
      %v355 = vpop.f32.mrf.mxu0
      %356 = vmatprep.mubr.f32.mxu0 0.0
      %357 = vmatmul.mubr.f32.gmra.mxu0 %v235
      %v358 = vpop.f32.mrf.mxu0
      %v359 = vadd.f32 0.0, %v358
      %v360 = vpop.f32.mrf.mxu0
      %361 = vmatprep.mubr.f32.mxu0 0.0
      %362 = vmatmul.mubr.f32.gmra.mxu0 %v236
      %v363 = vpop.f32.mrf.mxu0
      %v364 = vadd.f32 0.0, %v363
      %v365 = vpop.f32.mrf.mxu0
      %366 = vmatprep.mubr.f32.mxu0 0.0
      %367 = vmatmul.mubr.f32.gmra.mxu0 %v237
      %v368 = vpop.f32.mrf.mxu0
      %v369 = vadd.f32 0.0, %v368
      %v370 = vpop.f32.mrf.mxu0
      %371 = vmatprep.mubr.f32.mxu0 0.0
      %372 = vmatmul.mubr.f32.gmra.mxu0 %v238
      %v373 = vpop.f32.mrf.mxu0
      %v374 = vadd.f32 0.0, %v373
      %v375 = vpop.f32.mrf.mxu0
      %376 = vmatprep.mubr.f32.mxu0 0.0
      %377 = vmatmul.mubr.f32.gmra.mxu0 %v239
      %v378 = vpop.f32.mrf.mxu0
      %v379 = vadd.f32 0.0, %v378
      %v380 = vpop.f32.mrf.mxu0
      %381 = vmatprep.mubr.f32.mxu0 0.0
      %382 = vmatmul.mubr.f32.gmra.mxu0 %v240
      %v383 = vpop.f32.mrf.mxu0
      %v384 = vadd.f32 0.0, %v383
      %v385 = vpop.f32.mrf.mxu0
      %386 = vmatprep.mubr.f32.mxu0 0.0
      %387 = vmatmul.mubr.f32.gmra.mxu0 %v241
      %v388 = vpop.f32.mrf.mxu0
      %v389 = vadd.f32 0.0, %v388
      %v390 = vpop.f32.mrf.mxu0
      %391 = vmatprep.mubr.f32.mxu0 0.0
      %392 = vmatmul.mubr.f32.gmra.mxu0 %v242
      %v393 = vpop.f32.mrf.mxu0
      %v394 = vadd.f32 0.0, %v393
      %v395 = vpop.f32.mrf.mxu0
      %396 = vmatprep.mubr.f32.mxu0 0.0
      %397 = vmatmul.mubr.f32.gmra.mxu0 %v243
      %v398 = vpop.f32.mrf.mxu0
      %v399 = vadd.f32 0.0, %v398
      %v400 = vpop.f32.mrf.mxu0
      %401 = vmatprep.mubr.f32.mxu0 0.0
      %402 = vmatmul.mubr.f32.gmra.mxu0 %v244
      %v403 = vpop.f32.mrf.mxu0
      %v404 = vadd.f32 0.0, %v403
      %v405 = vpop.f32.mrf.mxu0
      %406 = vdwg.mxu0
      %407 = vmatprep.subr.mxu0 0.0
      %408 = vmatpush1.msra.mxu0 %v228
      %409 = vmatprep.subr.mxu0 0.0
      %410 = vmatpush1.msra.mxu0 %v227
      %411 = vmatprep.subr.mxu0 0.0
      %412 = vmatpush1.msra.mxu0 %v226
      %413 = vmatprep.subr.mxu0 0.0
      %414 = vmatpush1.msra.mxu0 %v225
      %415 = vmatprep.subr.mxu0 0.0
      %416 = vmatpush1.msra.mxu0 %v224
      %417 = vmatprep.subr.mxu0 0.0
      %418 = vmatpush1.msra.mxu0 %v223
      %419 = vmatprep.subr.mxu0 0.0
      %420 = vmatpush1.msra.mxu0 %v222
      %421 = vmatprep.subr.mxu0 0.0
      %422 = vmatpush1.msra.mxu0 %v221
      %423 = vmatprep.subr.mxu0 0.0
      %424 = vmatpush1.msra.mxu0 %v220
      %425 = vmatprep.subr.mxu0 0.0
      %426 = vmatpush1.msra.mxu0 %v219
      %427 = vmatprep.subr.mxu0 0.0
      %428 = vmatpush1.msra.mxu0 %v218
      %429 = vmatprep.subr.mxu0 0.0
      %430 = vmatpush1.msra.mxu0 %v217
      %431 = vmatprep.subr.mxu0 0.0
      %432 = vmatpush1.msra.mxu0 %v216
      %433 = vmatprep.subr.mxu0 0.0
      %434 = vmatpush1.msra.mxu0 %v215
      %435 = vmatprep.subr.mxu0 0.0
      %436 = vmatpush1.msra.mxu0 %v214
      %437 = vmatprep.subr.mxu0 0.0
      %438 = vmatpush1.msra.mxu0 %v213
      %439 = vmatprep.subr.mxu0 0.0
      %440 = vmatpush2.msra.mxu0 0.0
      %441 = vmatprep.subr.mxu0 0.0
      %442 = vmatpush2.msra.mxu0 0.0
      %443 = vmatprep.subr.mxu0 0.0
      %444 = vmatpush2.msra.mxu0 0.0
      %445 = vmatprep.subr.mxu0 0.0
      %446 = vmatpush2.msra.mxu0 0.0
      %447 = vmatprep.subr.mxu0 0.0
      %448 = vmatpush2.msra.mxu0 0.0
      %449 = vmatprep.subr.mxu0 0.0
      %450 = vmatpush2.msra.mxu0 0.0
      %451 = vmatprep.subr.mxu0 0.0
      %452 = vmatpush2.msra.mxu0 0.0
      %453 = vmatprep.subr.mxu0 0.0
      %454 = vmatpush2.msra.mxu0 0.0
      %455 = vmatprep.subr.mxu0 0.0
      %456 = vmatpush2.msra.mxu0 0.0
      %457 = vmatprep.subr.mxu0 0.0
      %458 = vmatpush2.msra.mxu0 0.0
      %459 = vmatprep.subr.mxu0 0.0
      %460 = vmatpush2.msra.mxu0 0.0
      %461 = vmatprep.subr.mxu0 0.0
      %462 = vmatpush2.msra.mxu0 0.0
      %463 = vmatprep.subr.mxu0 0.0
      %464 = vmatpush2.msra.mxu0 0.0
      %465 = vmatprep.subr.mxu0 0.0
      %466 = vmatpush2.msra.mxu0 0.0
      %467 = vmatprep.subr.mxu0 0.0
      %468 = vmatpush2.msra.mxu0 0.0
      %469 = vmatprep.subr.mxu0 0.0
      %470 = vmatpush2.msra.mxu0 0.0
      %471 = vmatprep.mubr.f32.mxu0 0.0
      %472 = vmatmul.mubr.f32.gmra.mxu0 %v197
      %v473 = vpop.f32.mrf.mxu0
      %v474 = vadd.f32 %v329, %v473
      %v475 = vpop.f32.mrf.mxu0
      %476 = vmatprep.mubr.f32.mxu0 0.0
      %477 = vmatmul.mubr.f32.gmra.mxu0 %v198
      %v478 = vpop.f32.mrf.mxu0
      %v479 = vadd.f32 %v334, %v478
      %v480 = vpop.f32.mrf.mxu0
      %481 = vmatprep.mubr.f32.mxu0 0.0
      %482 = vmatmul.mubr.f32.gmra.mxu0 %v199
      %v483 = vpop.f32.mrf.mxu0
      %v484 = vadd.f32 %v339, %v483
      %v485 = vpop.f32.mrf.mxu0
      %486 = vmatprep.mubr.f32.mxu0 0.0
      %487 = vmatmul.mubr.f32.gmra.mxu0 %v200
      %v488 = vpop.f32.mrf.mxu0
      %v489 = vadd.f32 %v344, %v488
      %v490 = vpop.f32.mrf.mxu0
      %491 = vmatprep.mubr.f32.mxu0 0.0
      %492 = vmatmul.mubr.f32.gmra.mxu0 %v201
      %v493 = vpop.f32.mrf.mxu0
      %v494 = vadd.f32 %v349, %v493
      %v495 = vpop.f32.mrf.mxu0
      %496 = vmatprep.mubr.f32.mxu0 0.0
      %497 = vmatmul.mubr.f32.gmra.mxu0 %v202
      %v498 = vpop.f32.mrf.mxu0
      %v499 = vadd.f32 %v354, %v498
      %v500 = vpop.f32.mrf.mxu0
      %501 = vmatprep.mubr.f32.mxu0 0.0
      %502 = vmatmul.mubr.f32.gmra.mxu0 %v203
      %v503 = vpop.f32.mrf.mxu0
      %v504 = vadd.f32 %v359, %v503
      %v505 = vpop.f32.mrf.mxu0
      %506 = vmatprep.mubr.f32.mxu0 0.0
      %507 = vmatmul.mubr.f32.gmra.mxu0 %v204
      %v508 = vpop.f32.mrf.mxu0
      %v509 = vadd.f32 %v364, %v508
      %v510 = vpop.f32.mrf.mxu0
      %511 = vmatprep.mubr.f32.mxu0 0.0
      %512 = vmatmul.mubr.f32.gmra.mxu0 %v205
      %v513 = vpop.f32.mrf.mxu0
      %v514 = vadd.f32 %v369, %v513
      %v515 = vpop.f32.mrf.mxu0
      %516 = vmatprep.mubr.f32.mxu0 0.0
      %517 = vmatmul.mubr.f32.gmra.mxu0 %v206
      %v518 = vpop.f32.mrf.mxu0
      %v519 = vadd.f32 %v374, %v518
      %v520 = vpop.f32.mrf.mxu0
      %521 = vmatprep.mubr.f32.mxu0 0.0
      %522 = vmatmul.mubr.f32.gmra.mxu0 %v207
      %v523 = vpop.f32.mrf.mxu0
      %v524 = vadd.f32 %v379, %v523
      %v525 = vpop.f32.mrf.mxu0
      %526 = vmatprep.mubr.f32.mxu0 0.0
      %527 = vmatmul.mubr.f32.gmra.mxu0 %v208
      %v528 = vpop.f32.mrf.mxu0
      %v529 = vadd.f32 %v384, %v528
      %v530 = vpop.f32.mrf.mxu0
      %531 = vmatprep.mubr.f32.mxu0 0.0
      %532 = vmatmul.mubr.f32.gmra.mxu0 %v209
      %v533 = vpop.f32.mrf.mxu0
      %v534 = vadd.f32 %v389, %v533
      %v535 = vpop.f32.mrf.mxu0
      %536 = vmatprep.mubr.f32.mxu0 0.0
      %537 = vmatmul.mubr.f32.gmra.mxu0 %v210
      %v538 = vpop.f32.mrf.mxu0
      %v539 = vadd.f32 %v394, %v538
      %v540 = vpop.f32.mrf.mxu0
      %541 = vmatprep.mubr.f32.mxu0 0.0
      %542 = vmatmul.mubr.f32.gmra.mxu0 %v211
      %v543 = vpop.f32.mrf.mxu0
      %v544 = vadd.f32 %v399, %v543
      %v545 = vpop.f32.mrf.mxu0
      %546 = vmatprep.mubr.f32.mxu0 0.0
      %547 = vmatmul.mubr.f32.gmra.mxu0 %v212
      %v548 = vpop.f32.mrf.mxu0
      %v549 = vadd.f32 %v404, %v548
      %v550 = vpop.f32.mrf.mxu0
      %551 = vdwg.mxu0
      %v552 = vld [vmem:[%s196 + $0x2] sm:$0xff]
      %v553 = vld [vmem:[%s196 + $0xa] sm:$0xff]
      %v554 = vld [vmem:[%s196 + $0x1a] sm:$0xff]
      %v555 = vld [vmem:[%s196 + $0x22] sm:$0xff]
      %v556 = vld [vmem:[%s196 + $0x32] sm:$0xff]
      %v557 = vld [vmem:[%s196 + $0x3a] sm:$0xff]
      %v558 = vld [vmem:[%s196 + $0x4a] sm:$0xff]
      %v559 = vld [vmem:[%s196 + $0x52] sm:$0xff]
      %v560 = vld [vmem:[%s196 + $0x62] sm:$0xff]
      %v561 = vld [vmem:[%s196 + $0x6a] sm:$0xff]
      %v562 = vld [vmem:[%s196 + $0x7a] sm:$0xff]
      %v563 = vld [vmem:[%s196 + $0x82] sm:$0xff]
      %v564 = vld [vmem:[%s196 + $0x92] sm:$0xff]
      %v565 = vld [vmem:[%s196 + $0x9a] sm:$0xff]
      %v566 = vld [vmem:[%s196 + $0xaa] sm:$0xff]
      %v567 = vld [vmem:[%s196 + $0xb2] sm:$0xff]
      %s568 = scalar_lea.vmem %s1, 256
      %v569 = vld [vmem:[%s568] sm:$0xff]
      %v570 = vld [vmem:[%s568 + $0x8] sm:$0xff]
      %v571 = vld [vmem:[%s568 + $0x10] sm:$0xff]
      %v572 = vld [vmem:[%s568 + $0x18] sm:$0xff]
      %v573 = vld [vmem:[%s568 + $0x20] sm:$0xff]
      %v574 = vld [vmem:[%s568 + $0x28] sm:$0xff]
      %v575 = vld [vmem:[%s568 + $0x30] sm:$0xff]
      %v576 = vld [vmem:[%s568 + $0x38] sm:$0xff]
      %v577 = vld [vmem:[%s568 + $0x40] sm:$0xff]
      %v578 = vld [vmem:[%s568 + $0x48] sm:$0xff]
      %v579 = vld [vmem:[%s568 + $0x50] sm:$0xff]
      %v580 = vld [vmem:[%s568 + $0x58] sm:$0xff]
      %v581 = vld [vmem:[%s568 + $0x60] sm:$0xff]
      %v582 = vld [vmem:[%s568 + $0x68] sm:$0xff]
      %v583 = vld [vmem:[%s568 + $0x70] sm:$0xff]
      %v584 = vld [vmem:[%s568 + $0x78] sm:$0xff]
      %585 = vmatprep.subr.mxu0 0.0
      %586 = vmatpush1.msra.mxu0 %v584
      %587 = vmatprep.subr.mxu0 0.0
      %588 = vmatpush1.msra.mxu0 %v583
      %589 = vmatprep.subr.mxu0 0.0
      %590 = vmatpush1.msra.mxu0 %v582
      %591 = vmatprep.subr.mxu0 0.0
      %592 = vmatpush1.msra.mxu0 %v581
      %593 = vmatprep.subr.mxu0 0.0
      %594 = vmatpush1.msra.mxu0 %v580
      %595 = vmatprep.subr.mxu0 0.0
      %596 = vmatpush1.msra.mxu0 %v579
      %597 = vmatprep.subr.mxu0 0.0
      %598 = vmatpush1.msra.mxu0 %v578
      %599 = vmatprep.subr.mxu0 0.0
      %600 = vmatpush1.msra.mxu0 %v577
      %601 = vmatprep.subr.mxu0 0.0
      %602 = vmatpush1.msra.mxu0 %v576
      %603 = vmatprep.subr.mxu0 0.0
      %604 = vmatpush1.msra.mxu0 %v575
      %605 = vmatprep.subr.mxu0 0.0
      %606 = vmatpush1.msra.mxu0 %v574
      %607 = vmatprep.subr.mxu0 0.0
      %608 = vmatpush1.msra.mxu0 %v573
      %609 = vmatprep.subr.mxu0 0.0
      %610 = vmatpush1.msra.mxu0 %v572
      %611 = vmatprep.subr.mxu0 0.0
      %612 = vmatpush1.msra.mxu0 %v571
      %613 = vmatprep.subr.mxu0 0.0
      %614 = vmatpush1.msra.mxu0 %v570
      %615 = vmatprep.subr.mxu0 0.0
      %616 = vmatpush1.msra.mxu0 %v569
      %617 = vmatprep.subr.mxu0 0.0
      %618 = vmatpush2.msra.mxu0 0.0
      %619 = vmatprep.subr.mxu0 0.0
      %620 = vmatpush2.msra.mxu0 0.0
      %621 = vmatprep.subr.mxu0 0.0
      %622 = vmatpush2.msra.mxu0 0.0
      %623 = vmatprep.subr.mxu0 0.0
      %624 = vmatpush2.msra.mxu0 0.0
      %625 = vmatprep.subr.mxu0 0.0
      %626 = vmatpush2.msra.mxu0 0.0
      %627 = vmatprep.subr.mxu0 0.0
      %628 = vmatpush2.msra.mxu0 0.0
      %629 = vmatprep.subr.mxu0 0.0
      %630 = vmatpush2.msra.mxu0 0.0
      %631 = vmatprep.subr.mxu0 0.0
      %632 = vmatpush2.msra.mxu0 0.0
      %633 = vmatprep.subr.mxu0 0.0
      %634 = vmatpush2.msra.mxu0 0.0
      %635 = vmatprep.subr.mxu0 0.0
      %636 = vmatpush2.msra.mxu0 0.0
      %637 = vmatprep.subr.mxu0 0.0
      %638 = vmatpush2.msra.mxu0 0.0
      %639 = vmatprep.subr.mxu0 0.0
      %640 = vmatpush2.msra.mxu0 0.0
      %641 = vmatprep.subr.mxu0 0.0
      %642 = vmatpush2.msra.mxu0 0.0
      %643 = vmatprep.subr.mxu0 0.0
      %644 = vmatpush2.msra.mxu0 0.0
      %645 = vmatprep.subr.mxu0 0.0
      %646 = vmatpush2.msra.mxu0 0.0
      %647 = vmatprep.subr.mxu0 0.0
      %648 = vmatpush2.msra.mxu0 0.0
      %649 = vmatprep.mubr.f32.mxu0 0.0
      %650 = vmatmul.mubr.f32.gmra.mxu0 %v552
      %v651 = vpop.f32.mrf.mxu0
      %v652 = vadd.f32 0.0, %v651
      %v653 = vpop.f32.mrf.mxu0
      %654 = vmatprep.mubr.f32.mxu0 0.0
      %655 = vmatmul.mubr.f32.gmra.mxu0 %v553
      %v656 = vpop.f32.mrf.mxu0
      %v657 = vadd.f32 0.0, %v656
      %v658 = vpop.f32.mrf.mxu0
      %659 = vmatprep.mubr.f32.mxu0 0.0
      %660 = vmatmul.mubr.f32.gmra.mxu0 %v554
      %v661 = vpop.f32.mrf.mxu0
      %v662 = vadd.f32 0.0, %v661
      %v663 = vpop.f32.mrf.mxu0
      %664 = vmatprep.mubr.f32.mxu0 0.0
      %665 = vmatmul.mubr.f32.gmra.mxu0 %v555
      %v666 = vpop.f32.mrf.mxu0
      %v667 = vadd.f32 0.0, %v666
      %v668 = vpop.f32.mrf.mxu0
      %669 = vmatprep.mubr.f32.mxu0 0.0
      %670 = vmatmul.mubr.f32.gmra.mxu0 %v556
      %v671 = vpop.f32.mrf.mxu0
      %v672 = vadd.f32 0.0, %v671
      %v673 = vpop.f32.mrf.mxu0
      %674 = vmatprep.mubr.f32.mxu0 0.0
      %675 = vmatmul.mubr.f32.gmra.mxu0 %v557
      %v676 = vpop.f32.mrf.mxu0
      %v677 = vadd.f32 0.0, %v676
      %v678 = vpop.f32.mrf.mxu0
      %679 = vmatprep.mubr.f32.mxu0 0.0
      %680 = vmatmul.mubr.f32.gmra.mxu0 %v558
      %v681 = vpop.f32.mrf.mxu0
      %v682 = vadd.f32 0.0, %v681
      %v683 = vpop.f32.mrf.mxu0
      %684 = vmatprep.mubr.f32.mxu0 0.0
      %685 = vmatmul.mubr.f32.gmra.mxu0 %v559
      %v686 = vpop.f32.mrf.mxu0
      %v687 = vadd.f32 0.0, %v686
      %v688 = vpop.f32.mrf.mxu0
      %689 = vmatprep.mubr.f32.mxu0 0.0
      %690 = vmatmul.mubr.f32.gmra.mxu0 %v560
      %v691 = vpop.f32.mrf.mxu0
      %v692 = vadd.f32 0.0, %v691
      %v693 = vpop.f32.mrf.mxu0
      %694 = vmatprep.mubr.f32.mxu0 0.0
      %695 = vmatmul.mubr.f32.gmra.mxu0 %v561
      %v696 = vpop.f32.mrf.mxu0
      %v697 = vadd.f32 0.0, %v696
      %v698 = vpop.f32.mrf.mxu0
      %699 = vmatprep.mubr.f32.mxu0 0.0
      %700 = vmatmul.mubr.f32.gmra.mxu0 %v562
      %v701 = vpop.f32.mrf.mxu0
      %v702 = vadd.f32 0.0, %v701
      %v703 = vpop.f32.mrf.mxu0
      %704 = vmatprep.mubr.f32.mxu0 0.0
      %705 = vmatmul.mubr.f32.gmra.mxu0 %v563
      %v706 = vpop.f32.mrf.mxu0
      %v707 = vadd.f32 0.0, %v706
      %v708 = vpop.f32.mrf.mxu0
      %709 = vmatprep.mubr.f32.mxu0 0.0
      %710 = vmatmul.mubr.f32.gmra.mxu0 %v564
      %v711 = vpop.f32.mrf.mxu0
      %v712 = vadd.f32 0.0, %v711
      %v713 = vpop.f32.mrf.mxu0
      %714 = vmatprep.mubr.f32.mxu0 0.0
      %715 = vmatmul.mubr.f32.gmra.mxu0 %v565
      %v716 = vpop.f32.mrf.mxu0
      %v717 = vadd.f32 0.0, %v716
      %v718 = vpop.f32.mrf.mxu0
      %719 = vmatprep.mubr.f32.mxu0 0.0
      %720 = vmatmul.mubr.f32.gmra.mxu0 %v566
      %v721 = vpop.f32.mrf.mxu0
      %v722 = vadd.f32 0.0, %v721
      %v723 = vpop.f32.mrf.mxu0
      %724 = vmatprep.mubr.f32.mxu0 0.0
      %725 = vmatmul.mubr.f32.gmra.mxu0 %v567
      %v726 = vpop.f32.mrf.mxu0
      %v727 = vadd.f32 0.0, %v726
      %v728 = vpop.f32.mrf.mxu0
      %729 = vdwg.mxu0
      %v730 = vadd.f32 %v474, %v652
      %v731 = vadd.f32 %v479, %v657
      %v732 = vadd.f32 %v484, %v662
      %v733 = vadd.f32 %v489, %v667
      %v734 = vadd.f32 %v494, %v672
      %v735 = vadd.f32 %v499, %v677
      %v736 = vadd.f32 %v504, %v682
      %v737 = vadd.f32 %v509, %v687
      %v738 = vadd.f32 %v514, %v692
      %v739 = vadd.f32 %v519, %v697
      %v740 = vadd.f32 %v524, %v702
      %v741 = vadd.f32 %v529, %v707
      %v742 = vadd.f32 %v534, %v712
      %v743 = vadd.f32 %v539, %v717
      %v744 = vadd.f32 %v544, %v722
      %v745 = vadd.f32 %v549, %v727
      %s746 = sadd.s32 %s194, 1
      %s747 = smul.u32 %s746, 24
      %s748 = scalar_lea.vmem %s183, %s747
      %v749 = vld [vmem:[%s748] sm:$0xff]
      %v750 = vld [vmem:[%s748 + $0x8] sm:$0xff]
      %v751 = vld [vmem:[%s748 + $0x18] sm:$0xff]
      %v752 = vld [vmem:[%s748 + $0x20] sm:$0xff]
      %v753 = vld [vmem:[%s748 + $0x30] sm:$0xff]
      %v754 = vld [vmem:[%s748 + $0x38] sm:$0xff]
      %v755 = vld [vmem:[%s748 + $0x48] sm:$0xff]
      %v756 = vld [vmem:[%s748 + $0x50] sm:$0xff]
      %v757 = vld [vmem:[%s748 + $0x60] sm:$0xff]
      %v758 = vld [vmem:[%s748 + $0x68] sm:$0xff]
      %v759 = vld [vmem:[%s748 + $0x78] sm:$0xff]
      %v760 = vld [vmem:[%s748 + $0x80] sm:$0xff]
      %v761 = vld [vmem:[%s748 + $0x90] sm:$0xff]
      %v762 = vld [vmem:[%s748 + $0x98] sm:$0xff]
      %v763 = vld [vmem:[%s748 + $0xa8] sm:$0xff]
      %v764 = vld [vmem:[%s748 + $0xb0] sm:$0xff]
      %s765 = scalar_lea.vmem %s1, 384
      %v766 = vld [vmem:[%s765] sm:$0xff]
      %v767 = vld [vmem:[%s765 + $0x8] sm:$0xff]
      %v768 = vld [vmem:[%s765 + $0x10] sm:$0xff]
      %v769 = vld [vmem:[%s765 + $0x18] sm:$0xff]
      %v770 = vld [vmem:[%s765 + $0x20] sm:$0xff]
      %v771 = vld [vmem:[%s765 + $0x28] sm:$0xff]
      %v772 = vld [vmem:[%s765 + $0x30] sm:$0xff]
      %v773 = vld [vmem:[%s765 + $0x38] sm:$0xff]
      %v774 = vld [vmem:[%s765 + $0x40] sm:$0xff]
      %v775 = vld [vmem:[%s765 + $0x48] sm:$0xff]
      %v776 = vld [vmem:[%s765 + $0x50] sm:$0xff]
      %v777 = vld [vmem:[%s765 + $0x58] sm:$0xff]
      %v778 = vld [vmem:[%s765 + $0x60] sm:$0xff]
      %v779 = vld [vmem:[%s765 + $0x68] sm:$0xff]
      %v780 = vld [vmem:[%s765 + $0x70] sm:$0xff]
      %v781 = vld [vmem:[%s765 + $0x78] sm:$0xff]
      %782 = vmatprep.subr.mxu0 0.0
      %783 = vmatpush1.msra.mxu0 %v781
      %784 = vmatprep.subr.mxu0 0.0
      %785 = vmatpush1.msra.mxu0 %v780
      %786 = vmatprep.subr.mxu0 0.0
      %787 = vmatpush1.msra.mxu0 %v779
      %788 = vmatprep.subr.mxu0 0.0
      %789 = vmatpush1.msra.mxu0 %v778
      %790 = vmatprep.subr.mxu0 0.0
      %791 = vmatpush1.msra.mxu0 %v777
      %792 = vmatprep.subr.mxu0 0.0
      %793 = vmatpush1.msra.mxu0 %v776
      %794 = vmatprep.subr.mxu0 0.0
      %795 = vmatpush1.msra.mxu0 %v775
      %796 = vmatprep.subr.mxu0 0.0
      %797 = vmatpush1.msra.mxu0 %v774
      %798 = vmatprep.subr.mxu0 0.0
      %799 = vmatpush1.msra.mxu0 %v773
      %800 = vmatprep.subr.mxu0 0.0
      %801 = vmatpush1.msra.mxu0 %v772
      %802 = vmatprep.subr.mxu0 0.0
      %803 = vmatpush1.msra.mxu0 %v771
      %804 = vmatprep.subr.mxu0 0.0
      %805 = vmatpush1.msra.mxu0 %v770
      %806 = vmatprep.subr.mxu0 0.0
      %807 = vmatpush1.msra.mxu0 %v769
      %808 = vmatprep.subr.mxu0 0.0
      %809 = vmatpush1.msra.mxu0 %v768
      %810 = vmatprep.subr.mxu0 0.0
      %811 = vmatpush1.msra.mxu0 %v767
      %812 = vmatprep.subr.mxu0 0.0
      %813 = vmatpush1.msra.mxu0 %v766
      %814 = vmatprep.subr.mxu0 0.0
      %815 = vmatpush2.msra.mxu0 0.0
      %816 = vmatprep.subr.mxu0 0.0
      %817 = vmatpush2.msra.mxu0 0.0
      %818 = vmatprep.subr.mxu0 0.0
      %819 = vmatpush2.msra.mxu0 0.0
      %820 = vmatprep.subr.mxu0 0.0
      %821 = vmatpush2.msra.mxu0 0.0
      %822 = vmatprep.subr.mxu0 0.0
      %823 = vmatpush2.msra.mxu0 0.0
      %824 = vmatprep.subr.mxu0 0.0
      %825 = vmatpush2.msra.mxu0 0.0
      %826 = vmatprep.subr.mxu0 0.0
      %827 = vmatpush2.msra.mxu0 0.0
      %828 = vmatprep.subr.mxu0 0.0
      %829 = vmatpush2.msra.mxu0 0.0
      %830 = vmatprep.subr.mxu0 0.0
      %831 = vmatpush2.msra.mxu0 0.0
      %832 = vmatprep.subr.mxu0 0.0
      %833 = vmatpush2.msra.mxu0 0.0
      %834 = vmatprep.subr.mxu0 0.0
      %835 = vmatpush2.msra.mxu0 0.0
      %836 = vmatprep.subr.mxu0 0.0
      %837 = vmatpush2.msra.mxu0 0.0
      %838 = vmatprep.subr.mxu0 0.0
      %839 = vmatpush2.msra.mxu0 0.0
      %840 = vmatprep.subr.mxu0 0.0
      %841 = vmatpush2.msra.mxu0 0.0
      %842 = vmatprep.subr.mxu0 0.0
      %843 = vmatpush2.msra.mxu0 0.0
      %844 = vmatprep.subr.mxu0 0.0
      %845 = vmatpush2.msra.mxu0 0.0
      %846 = vmatprep.mubr.f32.mxu0 0.0
      %847 = vmatmul.mubr.f32.gmra.mxu0 %v749
      %v848 = vpop.f32.mrf.mxu0
      %v849 = vadd.f32 0.0, %v848
      %v850 = vpop.f32.mrf.mxu0
      %851 = vmatprep.mubr.f32.mxu0 0.0
      %852 = vmatmul.mubr.f32.gmra.mxu0 %v750
      %v853 = vpop.f32.mrf.mxu0
      %v854 = vadd.f32 0.0, %v853
      %v855 = vpop.f32.mrf.mxu0
      %856 = vmatprep.mubr.f32.mxu0 0.0
      %857 = vmatmul.mubr.f32.gmra.mxu0 %v751
      %v858 = vpop.f32.mrf.mxu0
      %v859 = vadd.f32 0.0, %v858
      %v860 = vpop.f32.mrf.mxu0
      %861 = vmatprep.mubr.f32.mxu0 0.0
      %862 = vmatmul.mubr.f32.gmra.mxu0 %v752
      %v863 = vpop.f32.mrf.mxu0
      %v864 = vadd.f32 0.0, %v863
      %v865 = vpop.f32.mrf.mxu0
      %866 = vmatprep.mubr.f32.mxu0 0.0
      %867 = vmatmul.mubr.f32.gmra.mxu0 %v753
      %v868 = vpop.f32.mrf.mxu0
      %v869 = vadd.f32 0.0, %v868
      %v870 = vpop.f32.mrf.mxu0
      %871 = vmatprep.mubr.f32.mxu0 0.0
      %872 = vmatmul.mubr.f32.gmra.mxu0 %v754
      %v873 = vpop.f32.mrf.mxu0
      %v874 = vadd.f32 0.0, %v873
      %v875 = vpop.f32.mrf.mxu0
      %876 = vmatprep.mubr.f32.mxu0 0.0
      %877 = vmatmul.mubr.f32.gmra.mxu0 %v755
      %v878 = vpop.f32.mrf.mxu0
      %v879 = vadd.f32 0.0, %v878
      %v880 = vpop.f32.mrf.mxu0
      %881 = vmatprep.mubr.f32.mxu0 0.0
      %882 = vmatmul.mubr.f32.gmra.mxu0 %v756
      %v883 = vpop.f32.mrf.mxu0
      %v884 = vadd.f32 0.0, %v883
      %v885 = vpop.f32.mrf.mxu0
      %886 = vmatprep.mubr.f32.mxu0 0.0
      %887 = vmatmul.mubr.f32.gmra.mxu0 %v757
      %v888 = vpop.f32.mrf.mxu0
      %v889 = vadd.f32 0.0, %v888
      %v890 = vpop.f32.mrf.mxu0
      %891 = vmatprep.mubr.f32.mxu0 0.0
      %892 = vmatmul.mubr.f32.gmra.mxu0 %v758
      %v893 = vpop.f32.mrf.mxu0
      %v894 = vadd.f32 0.0, %v893
      %v895 = vpop.f32.mrf.mxu0
      %896 = vmatprep.mubr.f32.mxu0 0.0
      %897 = vmatmul.mubr.f32.gmra.mxu0 %v759
      %v898 = vpop.f32.mrf.mxu0
      %v899 = vadd.f32 0.0, %v898
      %v900 = vpop.f32.mrf.mxu0
      %901 = vmatprep.mubr.f32.mxu0 0.0
      %902 = vmatmul.mubr.f32.gmra.mxu0 %v760
      %v903 = vpop.f32.mrf.mxu0
      %v904 = vadd.f32 0.0, %v903
      %v905 = vpop.f32.mrf.mxu0
      %906 = vmatprep.mubr.f32.mxu0 0.0
      %907 = vmatmul.mubr.f32.gmra.mxu0 %v761
      %v908 = vpop.f32.mrf.mxu0
      %v909 = vadd.f32 0.0, %v908
      %v910 = vpop.f32.mrf.mxu0
      %911 = vmatprep.mubr.f32.mxu0 0.0
      %912 = vmatmul.mubr.f32.gmra.mxu0 %v762
      %v913 = vpop.f32.mrf.mxu0
      %v914 = vadd.f32 0.0, %v913
      %v915 = vpop.f32.mrf.mxu0
      %916 = vmatprep.mubr.f32.mxu0 0.0
      %917 = vmatmul.mubr.f32.gmra.mxu0 %v763
      %v918 = vpop.f32.mrf.mxu0
      %v919 = vadd.f32 0.0, %v918
      %v920 = vpop.f32.mrf.mxu0
      %921 = vmatprep.mubr.f32.mxu0 0.0
      %922 = vmatmul.mubr.f32.gmra.mxu0 %v764
      %v923 = vpop.f32.mrf.mxu0
      %v924 = vadd.f32 0.0, %v923
      %v925 = vpop.f32.mrf.mxu0
      %926 = vdwg.mxu0
      %v927 = vadd.f32 %v730, %v849
      %v928 = vadd.f32 %v731, %v854
      %v929 = vadd.f32 %v732, %v859
      %v930 = vadd.f32 %v733, %v864
      %v931 = vadd.f32 %v734, %v869
      %v932 = vadd.f32 %v735, %v874
      %v933 = vadd.f32 %v736, %v879
      %v934 = vadd.f32 %v737, %v884
      %v935 = vadd.f32 %v738, %v889
      %v936 = vadd.f32 %v739, %v894
      %v937 = vadd.f32 %v740, %v899
      %v938 = vadd.f32 %v741, %v904
      %v939 = vadd.f32 %v742, %v909
      %v940 = vadd.f32 %v743, %v914
      %v941 = vadd.f32 %v744, %v919
      %v942 = vadd.f32 %v745, %v924
      %v943 = vld [vmem:[%s748 + $0x1] sm:$0xff]
      %v944 = vld [vmem:[%s748 + $0x9] sm:$0xff]
      %v945 = vld [vmem:[%s748 + $0x19] sm:$0xff]
      %v946 = vld [vmem:[%s748 + $0x21] sm:$0xff]
      %v947 = vld [vmem:[%s748 + $0x31] sm:$0xff]
      %v948 = vld [vmem:[%s748 + $0x39] sm:$0xff]
      %v949 = vld [vmem:[%s748 + $0x49] sm:$0xff]
      %v950 = vld [vmem:[%s748 + $0x51] sm:$0xff]
      %v951 = vld [vmem:[%s748 + $0x61] sm:$0xff]
      %v952 = vld [vmem:[%s748 + $0x69] sm:$0xff]
      %v953 = vld [vmem:[%s748 + $0x79] sm:$0xff]
      %v954 = vld [vmem:[%s748 + $0x81] sm:$0xff]
      %v955 = vld [vmem:[%s748 + $0x91] sm:$0xff]
      %v956 = vld [vmem:[%s748 + $0x99] sm:$0xff]
      %v957 = vld [vmem:[%s748 + $0xa9] sm:$0xff]
      %v958 = vld [vmem:[%s748 + $0xb1] sm:$0xff]
      %s959 = scalar_lea.vmem %s1, 512
      %v960 = vld [vmem:[%s959] sm:$0xff]
      %v961 = vld [vmem:[%s959 + $0x8] sm:$0xff]
      %v962 = vld [vmem:[%s959 + $0x10] sm:$0xff]
      %v963 = vld [vmem:[%s959 + $0x18] sm:$0xff]
      %v964 = vld [vmem:[%s959 + $0x20] sm:$0xff]
      %v965 = vld [vmem:[%s959 + $0x28] sm:$0xff]
      %v966 = vld [vmem:[%s959 + $0x30] sm:$0xff]
      %v967 = vld [vmem:[%s959 + $0x38] sm:$0xff]
      %v968 = vld [vmem:[%s959 + $0x40] sm:$0xff]
      %v969 = vld [vmem:[%s959 + $0x48] sm:$0xff]
      %v970 = vld [vmem:[%s959 + $0x50] sm:$0xff]
      %v971 = vld [vmem:[%s959 + $0x58] sm:$0xff]
      %v972 = vld [vmem:[%s959 + $0x60] sm:$0xff]
      %v973 = vld [vmem:[%s959 + $0x68] sm:$0xff]
      %v974 = vld [vmem:[%s959 + $0x70] sm:$0xff]
      %v975 = vld [vmem:[%s959 + $0x78] sm:$0xff]
      %976 = vmatprep.subr.mxu0 0.0
      %977 = vmatpush1.msra.mxu0 %v975
      %978 = vmatprep.subr.mxu0 0.0
      %979 = vmatpush1.msra.mxu0 %v974
      %980 = vmatprep.subr.mxu0 0.0
      %981 = vmatpush1.msra.mxu0 %v973
      %982 = vmatprep.subr.mxu0 0.0
      %983 = vmatpush1.msra.mxu0 %v972
      %984 = vmatprep.subr.mxu0 0.0
      %985 = vmatpush1.msra.mxu0 %v971
      %986 = vmatprep.subr.mxu0 0.0
      %987 = vmatpush1.msra.mxu0 %v970
      %988 = vmatprep.subr.mxu0 0.0
      %989 = vmatpush1.msra.mxu0 %v969
      %990 = vmatprep.subr.mxu0 0.0
      %991 = vmatpush1.msra.mxu0 %v968
      %992 = vmatprep.subr.mxu0 0.0
      %993 = vmatpush1.msra.mxu0 %v967
      %994 = vmatprep.subr.mxu0 0.0
      %995 = vmatpush1.msra.mxu0 %v966
      %996 = vmatprep.subr.mxu0 0.0
      %997 = vmatpush1.msra.mxu0 %v965
      %998 = vmatprep.subr.mxu0 0.0
      %999 = vmatpush1.msra.mxu0 %v964
      %1000 = vmatprep.subr.mxu0 0.0
      %1001 = vmatpush1.msra.mxu0 %v963
      %1002 = vmatprep.subr.mxu0 0.0
      %1003 = vmatpush1.msra.mxu0 %v962
      %1004 = vmatprep.subr.mxu0 0.0
      %1005 = vmatpush1.msra.mxu0 %v961
      %1006 = vmatprep.subr.mxu0 0.0
      %1007 = vmatpush1.msra.mxu0 %v960
      %1008 = vmatprep.subr.mxu0 0.0
      %1009 = vmatpush2.msra.mxu0 0.0
      %1010 = vmatprep.subr.mxu0 0.0
      %1011 = vmatpush2.msra.mxu0 0.0
      %1012 = vmatprep.subr.mxu0 0.0
      %1013 = vmatpush2.msra.mxu0 0.0
      %1014 = vmatprep.subr.mxu0 0.0
      %1015 = vmatpush2.msra.mxu0 0.0
      %1016 = vmatprep.subr.mxu0 0.0
      %1017 = vmatpush2.msra.mxu0 0.0
      %1018 = vmatprep.subr.mxu0 0.0
      %1019 = vmatpush2.msra.mxu0 0.0
      %1020 = vmatprep.subr.mxu0 0.0
      %1021 = vmatpush2.msra.mxu0 0.0
      %1022 = vmatprep.subr.mxu0 0.0
      %1023 = vmatpush2.msra.mxu0 0.0
      %1024 = vmatprep.subr.mxu0 0.0
      %1025 = vmatpush2.msra.mxu0 0.0
      %1026 = vmatprep.subr.mxu0 0.0
      %1027 = vmatpush2.msra.mxu0 0.0
      %1028 = vmatprep.subr.mxu0 0.0
      %1029 = vmatpush2.msra.mxu0 0.0
      %1030 = vmatprep.subr.mxu0 0.0
      %1031 = vmatpush2.msra.mxu0 0.0
      %1032 = vmatprep.subr.mxu0 0.0
      %1033 = vmatpush2.msra.mxu0 0.0
      %1034 = vmatprep.subr.mxu0 0.0
      %1035 = vmatpush2.msra.mxu0 0.0
      %1036 = vmatprep.subr.mxu0 0.0
      %1037 = vmatpush2.msra.mxu0 0.0
      %1038 = vmatprep.subr.mxu0 0.0
      %1039 = vmatpush2.msra.mxu0 0.0
      %1040 = vmatprep.mubr.f32.mxu0 0.0
      %1041 = vmatmul.mubr.f32.gmra.mxu0 %v943
      %v1042 = vpop.f32.mrf.mxu0
      %v1043 = vadd.f32 0.0, %v1042
      %v1044 = vpop.f32.mrf.mxu0
      %1045 = vmatprep.mubr.f32.mxu0 0.0
      %1046 = vmatmul.mubr.f32.gmra.mxu0 %v944
      %v1047 = vpop.f32.mrf.mxu0
      %v1048 = vadd.f32 0.0, %v1047
      %v1049 = vpop.f32.mrf.mxu0
      %1050 = vmatprep.mubr.f32.mxu0 0.0
      %1051 = vmatmul.mubr.f32.gmra.mxu0 %v945
      %v1052 = vpop.f32.mrf.mxu0
      %v1053 = vadd.f32 0.0, %v1052
      %v1054 = vpop.f32.mrf.mxu0
      %1055 = vmatprep.mubr.f32.mxu0 0.0
      %1056 = vmatmul.mubr.f32.gmra.mxu0 %v946
      %v1057 = vpop.f32.mrf.mxu0
      %v1058 = vadd.f32 0.0, %v1057
      %v1059 = vpop.f32.mrf.mxu0
      %1060 = vmatprep.mubr.f32.mxu0 0.0
      %1061 = vmatmul.mubr.f32.gmra.mxu0 %v947
      %v1062 = vpop.f32.mrf.mxu0
      %v1063 = vadd.f32 0.0, %v1062
      %v1064 = vpop.f32.mrf.mxu0
      %1065 = vmatprep.mubr.f32.mxu0 0.0
      %1066 = vmatmul.mubr.f32.gmra.mxu0 %v948
      %v1067 = vpop.f32.mrf.mxu0
      %v1068 = vadd.f32 0.0, %v1067
      %v1069 = vpop.f32.mrf.mxu0
      %1070 = vmatprep.mubr.f32.mxu0 0.0
      %1071 = vmatmul.mubr.f32.gmra.mxu0 %v949
      %v1072 = vpop.f32.mrf.mxu0
      %v1073 = vadd.f32 0.0, %v1072
      %v1074 = vpop.f32.mrf.mxu0
      %1075 = vmatprep.mubr.f32.mxu0 0.0
      %1076 = vmatmul.mubr.f32.gmra.mxu0 %v950
      %v1077 = vpop.f32.mrf.mxu0
      %v1078 = vadd.f32 0.0, %v1077
      %v1079 = vpop.f32.mrf.mxu0
      %1080 = vmatprep.mubr.f32.mxu0 0.0
      %1081 = vmatmul.mubr.f32.gmra.mxu0 %v951
      %v1082 = vpop.f32.mrf.mxu0
      %v1083 = vadd.f32 0.0, %v1082
      %v1084 = vpop.f32.mrf.mxu0
      %1085 = vmatprep.mubr.f32.mxu0 0.0
      %1086 = vmatmul.mubr.f32.gmra.mxu0 %v952
      %v1087 = vpop.f32.mrf.mxu0
      %v1088 = vadd.f32 0.0, %v1087
      %v1089 = vpop.f32.mrf.mxu0
      %1090 = vmatprep.mubr.f32.mxu0 0.0
      %1091 = vmatmul.mubr.f32.gmra.mxu0 %v953
      %v1092 = vpop.f32.mrf.mxu0
      %v1093 = vadd.f32 0.0, %v1092
      %v1094 = vpop.f32.mrf.mxu0
      %1095 = vmatprep.mubr.f32.mxu0 0.0
      %1096 = vmatmul.mubr.f32.gmra.mxu0 %v954
      %v1097 = vpop.f32.mrf.mxu0
      %v1098 = vadd.f32 0.0, %v1097
      %v1099 = vpop.f32.mrf.mxu0
      %1100 = vmatprep.mubr.f32.mxu0 0.0
      %1101 = vmatmul.mubr.f32.gmra.mxu0 %v955
      %v1102 = vpop.f32.mrf.mxu0
      %v1103 = vadd.f32 0.0, %v1102
      %v1104 = vpop.f32.mrf.mxu0
      %1105 = vmatprep.mubr.f32.mxu0 0.0
      %1106 = vmatmul.mubr.f32.gmra.mxu0 %v956
      %v1107 = vpop.f32.mrf.mxu0
      %v1108 = vadd.f32 0.0, %v1107
      %v1109 = vpop.f32.mrf.mxu0
      %1110 = vmatprep.mubr.f32.mxu0 0.0
      %1111 = vmatmul.mubr.f32.gmra.mxu0 %v957
      %v1112 = vpop.f32.mrf.mxu0
      %v1113 = vadd.f32 0.0, %v1112
      %v1114 = vpop.f32.mrf.mxu0
      %1115 = vmatprep.mubr.f32.mxu0 0.0
      %1116 = vmatmul.mubr.f32.gmra.mxu0 %v958
      %v1117 = vpop.f32.mrf.mxu0
      %v1118 = vadd.f32 0.0, %v1117
      %v1119 = vpop.f32.mrf.mxu0
      %1120 = vdwg.mxu0
      %v1121 = vadd.f32 %v927, %v1043
      %v1122 = vadd.f32 %v928, %v1048
      %v1123 = vadd.f32 %v929, %v1053
      %v1124 = vadd.f32 %v930, %v1058
      %v1125 = vadd.f32 %v931, %v1063
      %v1126 = vadd.f32 %v932, %v1068
      %v1127 = vadd.f32 %v933, %v1073
      %v1128 = vadd.f32 %v934, %v1078
      %v1129 = vadd.f32 %v935, %v1083
      %v1130 = vadd.f32 %v936, %v1088
      %v1131 = vadd.f32 %v937, %v1093
      %v1132 = vadd.f32 %v938, %v1098
      %v1133 = vadd.f32 %v939, %v1103
      %v1134 = vadd.f32 %v940, %v1108
      %v1135 = vadd.f32 %v941, %v1113
      %v1136 = vadd.f32 %v942, %v1118
      %v1137 = vld [vmem:[%s748 + $0x2] sm:$0xff]
      %v1138 = vld [vmem:[%s748 + $0xa] sm:$0xff]
      %v1139 = vld [vmem:[%s748 + $0x1a] sm:$0xff]
      %v1140 = vld [vmem:[%s748 + $0x22] sm:$0xff]
      %v1141 = vld [vmem:[%s748 + $0x32] sm:$0xff]
      %v1142 = vld [vmem:[%s748 + $0x3a] sm:$0xff]
      %v1143 = vld [vmem:[%s748 + $0x4a] sm:$0xff]
      %v1144 = vld [vmem:[%s748 + $0x52] sm:$0xff]
      %v1145 = vld [vmem:[%s748 + $0x62] sm:$0xff]
      %v1146 = vld [vmem:[%s748 + $0x6a] sm:$0xff]
      %v1147 = vld [vmem:[%s748 + $0x7a] sm:$0xff]
      %v1148 = vld [vmem:[%s748 + $0x82] sm:$0xff]
      %v1149 = vld [vmem:[%s748 + $0x92] sm:$0xff]
      %v1150 = vld [vmem:[%s748 + $0x9a] sm:$0xff]
      %v1151 = vld [vmem:[%s748 + $0xaa] sm:$0xff]
      %v1152 = vld [vmem:[%s748 + $0xb2] sm:$0xff]
      %s1153 = scalar_lea.vmem %s1, 640
      %v1154 = vld [vmem:[%s1153] sm:$0xff]
      %v1155 = vld [vmem:[%s1153 + $0x8] sm:$0xff]
      %v1156 = vld [vmem:[%s1153 + $0x10] sm:$0xff]
      %v1157 = vld [vmem:[%s1153 + $0x18] sm:$0xff]
      %v1158 = vld [vmem:[%s1153 + $0x20] sm:$0xff]
      %v1159 = vld [vmem:[%s1153 + $0x28] sm:$0xff]
      %v1160 = vld [vmem:[%s1153 + $0x30] sm:$0xff]
      %v1161 = vld [vmem:[%s1153 + $0x38] sm:$0xff]
      %v1162 = vld [vmem:[%s1153 + $0x40] sm:$0xff]
      %v1163 = vld [vmem:[%s1153 + $0x48] sm:$0xff]
      %v1164 = vld [vmem:[%s1153 + $0x50] sm:$0xff]
      %v1165 = vld [vmem:[%s1153 + $0x58] sm:$0xff]
      %v1166 = vld [vmem:[%s1153 + $0x60] sm:$0xff]
      %v1167 = vld [vmem:[%s1153 + $0x68] sm:$0xff]
      %v1168 = vld [vmem:[%s1153 + $0x70] sm:$0xff]
      %v1169 = vld [vmem:[%s1153 + $0x78] sm:$0xff]
      %1170 = vmatprep.subr.mxu0 0.0
      %1171 = vmatpush1.msra.mxu0 %v1169
      %1172 = vmatprep.subr.mxu0 0.0
      %1173 = vmatpush1.msra.mxu0 %v1168
      %1174 = vmatprep.subr.mxu0 0.0
      %1175 = vmatpush1.msra.mxu0 %v1167
      %1176 = vmatprep.subr.mxu0 0.0
      %1177 = vmatpush1.msra.mxu0 %v1166
      %1178 = vmatprep.subr.mxu0 0.0
      %1179 = vmatpush1.msra.mxu0 %v1165
      %1180 = vmatprep.subr.mxu0 0.0
      %1181 = vmatpush1.msra.mxu0 %v1164
      %1182 = vmatprep.subr.mxu0 0.0
      %1183 = vmatpush1.msra.mxu0 %v1163
      %1184 = vmatprep.subr.mxu0 0.0
      %1185 = vmatpush1.msra.mxu0 %v1162
      %1186 = vmatprep.subr.mxu0 0.0
      %1187 = vmatpush1.msra.mxu0 %v1161
      %1188 = vmatprep.subr.mxu0 0.0
      %1189 = vmatpush1.msra.mxu0 %v1160
      %1190 = vmatprep.subr.mxu0 0.0
      %1191 = vmatpush1.msra.mxu0 %v1159
      %1192 = vmatprep.subr.mxu0 0.0
      %1193 = vmatpush1.msra.mxu0 %v1158
      %1194 = vmatprep.subr.mxu0 0.0
      %1195 = vmatpush1.msra.mxu0 %v1157
      %1196 = vmatprep.subr.mxu0 0.0
      %1197 = vmatpush1.msra.mxu0 %v1156
      %1198 = vmatprep.subr.mxu0 0.0
      %1199 = vmatpush1.msra.mxu0 %v1155
      %1200 = vmatprep.subr.mxu0 0.0
      %1201 = vmatpush1.msra.mxu0 %v1154
      %1202 = vmatprep.subr.mxu0 0.0
      %1203 = vmatpush2.msra.mxu0 0.0
      %1204 = vmatprep.subr.mxu0 0.0
      %1205 = vmatpush2.msra.mxu0 0.0
      %1206 = vmatprep.subr.mxu0 0.0
      %1207 = vmatpush2.msra.mxu0 0.0
      %1208 = vmatprep.subr.mxu0 0.0
      %1209 = vmatpush2.msra.mxu0 0.0
      %1210 = vmatprep.subr.mxu0 0.0
      %1211 = vmatpush2.msra.mxu0 0.0
      %1212 = vmatprep.subr.mxu0 0.0
      %1213 = vmatpush2.msra.mxu0 0.0
      %1214 = vmatprep.subr.mxu0 0.0
      %1215 = vmatpush2.msra.mxu0 0.0
      %1216 = vmatprep.subr.mxu0 0.0
      %1217 = vmatpush2.msra.mxu0 0.0
      %1218 = vmatprep.subr.mxu0 0.0
      %1219 = vmatpush2.msra.mxu0 0.0
      %1220 = vmatprep.subr.mxu0 0.0
      %1221 = vmatpush2.msra.mxu0 0.0
      %1222 = vmatprep.subr.mxu0 0.0
      %1223 = vmatpush2.msra.mxu0 0.0
      %1224 = vmatprep.subr.mxu0 0.0
      %1225 = vmatpush2.msra.mxu0 0.0
      %1226 = vmatprep.subr.mxu0 0.0
      %1227 = vmatpush2.msra.mxu0 0.0
      %1228 = vmatprep.subr.mxu0 0.0
      %1229 = vmatpush2.msra.mxu0 0.0
      %1230 = vmatprep.subr.mxu0 0.0
      %1231 = vmatpush2.msra.mxu0 0.0
      %1232 = vmatprep.subr.mxu0 0.0
      %1233 = vmatpush2.msra.mxu0 0.0
      %1234 = vmatprep.mubr.f32.mxu0 0.0
      %1235 = vmatmul.mubr.f32.gmra.mxu0 %v1137
      %v1236 = vpop.f32.mrf.mxu0
      %v1237 = vadd.f32 0.0, %v1236
      %v1238 = vpop.f32.mrf.mxu0
      %1239 = vmatprep.mubr.f32.mxu0 0.0
      %1240 = vmatmul.mubr.f32.gmra.mxu0 %v1138
      %v1241 = vpop.f32.mrf.mxu0
      %v1242 = vadd.f32 0.0, %v1241
      %v1243 = vpop.f32.mrf.mxu0
      %1244 = vmatprep.mubr.f32.mxu0 0.0
      %1245 = vmatmul.mubr.f32.gmra.mxu0 %v1139
      %v1246 = vpop.f32.mrf.mxu0
      %v1247 = vadd.f32 0.0, %v1246
      %v1248 = vpop.f32.mrf.mxu0
      %1249 = vmatprep.mubr.f32.mxu0 0.0
      %1250 = vmatmul.mubr.f32.gmra.mxu0 %v1140
      %v1251 = vpop.f32.mrf.mxu0
      %v1252 = vadd.f32 0.0, %v1251
      %v1253 = vpop.f32.mrf.mxu0
      %1254 = vmatprep.mubr.f32.mxu0 0.0
      %1255 = vmatmul.mubr.f32.gmra.mxu0 %v1141
      %v1256 = vpop.f32.mrf.mxu0
      %v1257 = vadd.f32 0.0, %v1256
      %v1258 = vpop.f32.mrf.mxu0
      %1259 = vmatprep.mubr.f32.mxu0 0.0
      %1260 = vmatmul.mubr.f32.gmra.mxu0 %v1142
      %v1261 = vpop.f32.mrf.mxu0
      %v1262 = vadd.f32 0.0, %v1261
      %v1263 = vpop.f32.mrf.mxu0
      %1264 = vmatprep.mubr.f32.mxu0 0.0
      %1265 = vmatmul.mubr.f32.gmra.mxu0 %v1143
      %v1266 = vpop.f32.mrf.mxu0
      %v1267 = vadd.f32 0.0, %v1266
      %v1268 = vpop.f32.mrf.mxu0
      %1269 = vmatprep.mubr.f32.mxu0 0.0
      %1270 = vmatmul.mubr.f32.gmra.mxu0 %v1144
      %v1271 = vpop.f32.mrf.mxu0
      %v1272 = vadd.f32 0.0, %v1271
      %v1273 = vpop.f32.mrf.mxu0
      %1274 = vmatprep.mubr.f32.mxu0 0.0
      %1275 = vmatmul.mubr.f32.gmra.mxu0 %v1145
      %v1276 = vpop.f32.mrf.mxu0
      %v1277 = vadd.f32 0.0, %v1276
      %v1278 = vpop.f32.mrf.mxu0
      %1279 = vmatprep.mubr.f32.mxu0 0.0
      %1280 = vmatmul.mubr.f32.gmra.mxu0 %v1146
      %v1281 = vpop.f32.mrf.mxu0
      %v1282 = vadd.f32 0.0, %v1281
      %v1283 = vpop.f32.mrf.mxu0
      %1284 = vmatprep.mubr.f32.mxu0 0.0
      %1285 = vmatmul.mubr.f32.gmra.mxu0 %v1147
      %v1286 = vpop.f32.mrf.mxu0
      %v1287 = vadd.f32 0.0, %v1286
      %v1288 = vpop.f32.mrf.mxu0
      %1289 = vmatprep.mubr.f32.mxu0 0.0
      %1290 = vmatmul.mubr.f32.gmra.mxu0 %v1148
      %v1291 = vpop.f32.mrf.mxu0
      %v1292 = vadd.f32 0.0, %v1291
      %v1293 = vpop.f32.mrf.mxu0
      %1294 = vmatprep.mubr.f32.mxu0 0.0
      %1295 = vmatmul.mubr.f32.gmra.mxu0 %v1149
      %v1296 = vpop.f32.mrf.mxu0
      %v1297 = vadd.f32 0.0, %v1296
      %v1298 = vpop.f32.mrf.mxu0
      %1299 = vmatprep.mubr.f32.mxu0 0.0
      %1300 = vmatmul.mubr.f32.gmra.mxu0 %v1150
      %v1301 = vpop.f32.mrf.mxu0
      %v1302 = vadd.f32 0.0, %v1301
      %v1303 = vpop.f32.mrf.mxu0
      %1304 = vmatprep.mubr.f32.mxu0 0.0
      %1305 = vmatmul.mubr.f32.gmra.mxu0 %v1151
      %v1306 = vpop.f32.mrf.mxu0
      %v1307 = vadd.f32 0.0, %v1306
      %v1308 = vpop.f32.mrf.mxu0
      %1309 = vmatprep.mubr.f32.mxu0 0.0
      %1310 = vmatmul.mubr.f32.gmra.mxu0 %v1152
      %v1311 = vpop.f32.mrf.mxu0
      %v1312 = vadd.f32 0.0, %v1311
      %v1313 = vpop.f32.mrf.mxu0
      %1314 = vdwg.mxu0
      %v1315 = vadd.f32 %v1121, %v1237
      %v1316 = vadd.f32 %v1122, %v1242
      %v1317 = vadd.f32 %v1123, %v1247
      %v1318 = vadd.f32 %v1124, %v1252
      %v1319 = vadd.f32 %v1125, %v1257
      %v1320 = vadd.f32 %v1126, %v1262
      %v1321 = vadd.f32 %v1127, %v1267
      %v1322 = vadd.f32 %v1128, %v1272
      %v1323 = vadd.f32 %v1129, %v1277
      %v1324 = vadd.f32 %v1130, %v1282
      %v1325 = vadd.f32 %v1131, %v1287
      %v1326 = vadd.f32 %v1132, %v1292
      %v1327 = vadd.f32 %v1133, %v1297
      %v1328 = vadd.f32 %v1134, %v1302
      %v1329 = vadd.f32 %v1135, %v1307
      %v1330 = vadd.f32 %v1136, %v1312
      %s1331 = sadd.s32 %s194, 2
      %s1332 = smul.u32 %s1331, 24
      %s1333 = scalar_lea.vmem %s183, %s1332
      %v1334 = vld [vmem:[%s1333] sm:$0xff]
      %v1335 = vld [vmem:[%s1333 + $0x8] sm:$0xff]
      %v1336 = vld [vmem:[%s1333 + $0x18] sm:$0xff]
      %v1337 = vld [vmem:[%s1333 + $0x20] sm:$0xff]
      %v1338 = vld [vmem:[%s1333 + $0x30] sm:$0xff]
      %v1339 = vld [vmem:[%s1333 + $0x38] sm:$0xff]
      %v1340 = vld [vmem:[%s1333 + $0x48] sm:$0xff]
      %v1341 = vld [vmem:[%s1333 + $0x50] sm:$0xff]
      %v1342 = vld [vmem:[%s1333 + $0x60] sm:$0xff]
      %v1343 = vld [vmem:[%s1333 + $0x68] sm:$0xff]
      %v1344 = vld [vmem:[%s1333 + $0x78] sm:$0xff]
      %v1345 = vld [vmem:[%s1333 + $0x80] sm:$0xff]
      %v1346 = vld [vmem:[%s1333 + $0x90] sm:$0xff]
      %v1347 = vld [vmem:[%s1333 + $0x98] sm:$0xff]
      %v1348 = vld [vmem:[%s1333 + $0xa8] sm:$0xff]
      %v1349 = vld [vmem:[%s1333 + $0xb0] sm:$0xff]
      %s1350 = scalar_lea.vmem %s1, 768
      %v1351 = vld [vmem:[%s1350] sm:$0xff]
      %v1352 = vld [vmem:[%s1350 + $0x8] sm:$0xff]
      %v1353 = vld [vmem:[%s1350 + $0x10] sm:$0xff]
      %v1354 = vld [vmem:[%s1350 + $0x18] sm:$0xff]
      %v1355 = vld [vmem:[%s1350 + $0x20] sm:$0xff]
      %v1356 = vld [vmem:[%s1350 + $0x28] sm:$0xff]
      %v1357 = vld [vmem:[%s1350 + $0x30] sm:$0xff]
      %v1358 = vld [vmem:[%s1350 + $0x38] sm:$0xff]
      %v1359 = vld [vmem:[%s1350 + $0x40] sm:$0xff]
      %v1360 = vld [vmem:[%s1350 + $0x48] sm:$0xff]
      %v1361 = vld [vmem:[%s1350 + $0x50] sm:$0xff]
      %v1362 = vld [vmem:[%s1350 + $0x58] sm:$0xff]
      %v1363 = vld [vmem:[%s1350 + $0x60] sm:$0xff]
      %v1364 = vld [vmem:[%s1350 + $0x68] sm:$0xff]
      %v1365 = vld [vmem:[%s1350 + $0x70] sm:$0xff]
      %v1366 = vld [vmem:[%s1350 + $0x78] sm:$0xff]
      %1367 = vmatprep.subr.mxu0 0.0
      %1368 = vmatpush1.msra.mxu0 %v1366
      %1369 = vmatprep.subr.mxu0 0.0
      %1370 = vmatpush1.msra.mxu0 %v1365
      %1371 = vmatprep.subr.mxu0 0.0
      %1372 = vmatpush1.msra.mxu0 %v1364
      %1373 = vmatprep.subr.mxu0 0.0
      %1374 = vmatpush1.msra.mxu0 %v1363
      %1375 = vmatprep.subr.mxu0 0.0
      %1376 = vmatpush1.msra.mxu0 %v1362
      %1377 = vmatprep.subr.mxu0 0.0
      %1378 = vmatpush1.msra.mxu0 %v1361
      %1379 = vmatprep.subr.mxu0 0.0
      %1380 = vmatpush1.msra.mxu0 %v1360
      %1381 = vmatprep.subr.mxu0 0.0
      %1382 = vmatpush1.msra.mxu0 %v1359
      %1383 = vmatprep.subr.mxu0 0.0
      %1384 = vmatpush1.msra.mxu0 %v1358
      %1385 = vmatprep.subr.mxu0 0.0
      %1386 = vmatpush1.msra.mxu0 %v1357
      %1387 = vmatprep.subr.mxu0 0.0
      %1388 = vmatpush1.msra.mxu0 %v1356
      %1389 = vmatprep.subr.mxu0 0.0
      %1390 = vmatpush1.msra.mxu0 %v1355
      %1391 = vmatprep.subr.mxu0 0.0
      %1392 = vmatpush1.msra.mxu0 %v1354
      %1393 = vmatprep.subr.mxu0 0.0
      %1394 = vmatpush1.msra.mxu0 %v1353
      %1395 = vmatprep.subr.mxu0 0.0
      %1396 = vmatpush1.msra.mxu0 %v1352
      %1397 = vmatprep.subr.mxu0 0.0
      %1398 = vmatpush1.msra.mxu0 %v1351
      %1399 = vmatprep.subr.mxu0 0.0
      %1400 = vmatpush2.msra.mxu0 0.0
      %1401 = vmatprep.subr.mxu0 0.0
      %1402 = vmatpush2.msra.mxu0 0.0
      %1403 = vmatprep.subr.mxu0 0.0
      %1404 = vmatpush2.msra.mxu0 0.0
      %1405 = vmatprep.subr.mxu0 0.0
      %1406 = vmatpush2.msra.mxu0 0.0
      %1407 = vmatprep.subr.mxu0 0.0
      %1408 = vmatpush2.msra.mxu0 0.0
      %1409 = vmatprep.subr.mxu0 0.0
      %1410 = vmatpush2.msra.mxu0 0.0
      %1411 = vmatprep.subr.mxu0 0.0
      %1412 = vmatpush2.msra.mxu0 0.0
      %1413 = vmatprep.subr.mxu0 0.0
      %1414 = vmatpush2.msra.mxu0 0.0
      %1415 = vmatprep.subr.mxu0 0.0
      %1416 = vmatpush2.msra.mxu0 0.0
      %1417 = vmatprep.subr.mxu0 0.0
      %1418 = vmatpush2.msra.mxu0 0.0
      %1419 = vmatprep.subr.mxu0 0.0
      %1420 = vmatpush2.msra.mxu0 0.0
      %1421 = vmatprep.subr.mxu0 0.0
      %1422 = vmatpush2.msra.mxu0 0.0
      %1423 = vmatprep.subr.mxu0 0.0
      %1424 = vmatpush2.msra.mxu0 0.0
      %1425 = vmatprep.subr.mxu0 0.0
      %1426 = vmatpush2.msra.mxu0 0.0
      %1427 = vmatprep.subr.mxu0 0.0
      %1428 = vmatpush2.msra.mxu0 0.0
      %1429 = vmatprep.subr.mxu0 0.0
      %1430 = vmatpush2.msra.mxu0 0.0
      %1431 = vmatprep.mubr.f32.mxu0 0.0
      %1432 = vmatmul.mubr.f32.gmra.mxu0 %v1334
      %v1433 = vpop.f32.mrf.mxu0
      %v1434 = vadd.f32 0.0, %v1433
      %v1435 = vpop.f32.mrf.mxu0
      %1436 = vmatprep.mubr.f32.mxu0 0.0
      %1437 = vmatmul.mubr.f32.gmra.mxu0 %v1335
      %v1438 = vpop.f32.mrf.mxu0
      %v1439 = vadd.f32 0.0, %v1438
      %v1440 = vpop.f32.mrf.mxu0
      %1441 = vmatprep.mubr.f32.mxu0 0.0
      %1442 = vmatmul.mubr.f32.gmra.mxu0 %v1336
      %v1443 = vpop.f32.mrf.mxu0
      %v1444 = vadd.f32 0.0, %v1443
      %v1445 = vpop.f32.mrf.mxu0
      %1446 = vmatprep.mubr.f32.mxu0 0.0
      %1447 = vmatmul.mubr.f32.gmra.mxu0 %v1337
      %v1448 = vpop.f32.mrf.mxu0
      %v1449 = vadd.f32 0.0, %v1448
      %v1450 = vpop.f32.mrf.mxu0
      %1451 = vmatprep.mubr.f32.mxu0 0.0
      %1452 = vmatmul.mubr.f32.gmra.mxu0 %v1338
      %v1453 = vpop.f32.mrf.mxu0
      %v1454 = vadd.f32 0.0, %v1453
      %v1455 = vpop.f32.mrf.mxu0
      %1456 = vmatprep.mubr.f32.mxu0 0.0
      %1457 = vmatmul.mubr.f32.gmra.mxu0 %v1339
      %v1458 = vpop.f32.mrf.mxu0
      %v1459 = vadd.f32 0.0, %v1458
      %v1460 = vpop.f32.mrf.mxu0
      %1461 = vmatprep.mubr.f32.mxu0 0.0
      %1462 = vmatmul.mubr.f32.gmra.mxu0 %v1340
      %v1463 = vpop.f32.mrf.mxu0
      %v1464 = vadd.f32 0.0, %v1463
      %v1465 = vpop.f32.mrf.mxu0
      %1466 = vmatprep.mubr.f32.mxu0 0.0
      %1467 = vmatmul.mubr.f32.gmra.mxu0 %v1341
      %v1468 = vpop.f32.mrf.mxu0
      %v1469 = vadd.f32 0.0, %v1468
      %v1470 = vpop.f32.mrf.mxu0
      %1471 = vmatprep.mubr.f32.mxu0 0.0
      %1472 = vmatmul.mubr.f32.gmra.mxu0 %v1342
      %v1473 = vpop.f32.mrf.mxu0
      %v1474 = vadd.f32 0.0, %v1473
      %v1475 = vpop.f32.mrf.mxu0
      %1476 = vmatprep.mubr.f32.mxu0 0.0
      %1477 = vmatmul.mubr.f32.gmra.mxu0 %v1343
      %v1478 = vpop.f32.mrf.mxu0
      %v1479 = vadd.f32 0.0, %v1478
      %v1480 = vpop.f32.mrf.mxu0
      %1481 = vmatprep.mubr.f32.mxu0 0.0
      %1482 = vmatmul.mubr.f32.gmra.mxu0 %v1344
      %v1483 = vpop.f32.mrf.mxu0
      %v1484 = vadd.f32 0.0, %v1483
      %v1485 = vpop.f32.mrf.mxu0
      %1486 = vmatprep.mubr.f32.mxu0 0.0
      %1487 = vmatmul.mubr.f32.gmra.mxu0 %v1345
      %v1488 = vpop.f32.mrf.mxu0
      %v1489 = vadd.f32 0.0, %v1488
      %v1490 = vpop.f32.mrf.mxu0
      %1491 = vmatprep.mubr.f32.mxu0 0.0
      %1492 = vmatmul.mubr.f32.gmra.mxu0 %v1346
      %v1493 = vpop.f32.mrf.mxu0
      %v1494 = vadd.f32 0.0, %v1493
      %v1495 = vpop.f32.mrf.mxu0
      %1496 = vmatprep.mubr.f32.mxu0 0.0
      %1497 = vmatmul.mubr.f32.gmra.mxu0 %v1347
      %v1498 = vpop.f32.mrf.mxu0
      %v1499 = vadd.f32 0.0, %v1498
      %v1500 = vpop.f32.mrf.mxu0
      %1501 = vmatprep.mubr.f32.mxu0 0.0
      %1502 = vmatmul.mubr.f32.gmra.mxu0 %v1348
      %v1503 = vpop.f32.mrf.mxu0
      %v1504 = vadd.f32 0.0, %v1503
      %v1505 = vpop.f32.mrf.mxu0
      %1506 = vmatprep.mubr.f32.mxu0 0.0
      %1507 = vmatmul.mubr.f32.gmra.mxu0 %v1349
      %v1508 = vpop.f32.mrf.mxu0
      %v1509 = vadd.f32 0.0, %v1508
      %v1510 = vpop.f32.mrf.mxu0
      %1511 = vdwg.mxu0
      %v1512 = vadd.f32 %v1315, %v1434
      %v1513 = vadd.f32 %v1316, %v1439
      %v1514 = vadd.f32 %v1317, %v1444
      %v1515 = vadd.f32 %v1318, %v1449
      %v1516 = vadd.f32 %v1319, %v1454
      %v1517 = vadd.f32 %v1320, %v1459
      %v1518 = vadd.f32 %v1321, %v1464
      %v1519 = vadd.f32 %v1322, %v1469
      %v1520 = vadd.f32 %v1323, %v1474
      %v1521 = vadd.f32 %v1324, %v1479
      %v1522 = vadd.f32 %v1325, %v1484
      %v1523 = vadd.f32 %v1326, %v1489
      %v1524 = vadd.f32 %v1327, %v1494
      %v1525 = vadd.f32 %v1328, %v1499
      %v1526 = vadd.f32 %v1329, %v1504
      %v1527 = vadd.f32 %v1330, %v1509
      %v1528 = vld [vmem:[%s1333 + $0x1] sm:$0xff]
      %v1529 = vld [vmem:[%s1333 + $0x9] sm:$0xff]
      %v1530 = vld [vmem:[%s1333 + $0x19] sm:$0xff]
      %v1531 = vld [vmem:[%s1333 + $0x21] sm:$0xff]
      %v1532 = vld [vmem:[%s1333 + $0x31] sm:$0xff]
      %v1533 = vld [vmem:[%s1333 + $0x39] sm:$0xff]
      %v1534 = vld [vmem:[%s1333 + $0x49] sm:$0xff]
      %v1535 = vld [vmem:[%s1333 + $0x51] sm:$0xff]
      %v1536 = vld [vmem:[%s1333 + $0x61] sm:$0xff]
      %v1537 = vld [vmem:[%s1333 + $0x69] sm:$0xff]
      %v1538 = vld [vmem:[%s1333 + $0x79] sm:$0xff]
      %v1539 = vld [vmem:[%s1333 + $0x81] sm:$0xff]
      %v1540 = vld [vmem:[%s1333 + $0x91] sm:$0xff]
      %v1541 = vld [vmem:[%s1333 + $0x99] sm:$0xff]
      %v1542 = vld [vmem:[%s1333 + $0xa9] sm:$0xff]
      %v1543 = vld [vmem:[%s1333 + $0xb1] sm:$0xff]
      %s1544 = scalar_lea.vmem %s1, 896
      %v1545 = vld [vmem:[%s1544] sm:$0xff]
      %v1546 = vld [vmem:[%s1544 + $0x8] sm:$0xff]
      %v1547 = vld [vmem:[%s1544 + $0x10] sm:$0xff]
      %v1548 = vld [vmem:[%s1544 + $0x18] sm:$0xff]
      %v1549 = vld [vmem:[%s1544 + $0x20] sm:$0xff]
      %v1550 = vld [vmem:[%s1544 + $0x28] sm:$0xff]
      %v1551 = vld [vmem:[%s1544 + $0x30] sm:$0xff]
      %v1552 = vld [vmem:[%s1544 + $0x38] sm:$0xff]
      %v1553 = vld [vmem:[%s1544 + $0x40] sm:$0xff]
      %v1554 = vld [vmem:[%s1544 + $0x48] sm:$0xff]
      %v1555 = vld [vmem:[%s1544 + $0x50] sm:$0xff]
      %v1556 = vld [vmem:[%s1544 + $0x58] sm:$0xff]
      %v1557 = vld [vmem:[%s1544 + $0x60] sm:$0xff]
      %v1558 = vld [vmem:[%s1544 + $0x68] sm:$0xff]
      %v1559 = vld [vmem:[%s1544 + $0x70] sm:$0xff]
      %v1560 = vld [vmem:[%s1544 + $0x78] sm:$0xff]
      %1561 = vmatprep.subr.mxu0 0.0
      %1562 = vmatpush1.msra.mxu0 %v1560
      %1563 = vmatprep.subr.mxu0 0.0
      %1564 = vmatpush1.msra.mxu0 %v1559
      %1565 = vmatprep.subr.mxu0 0.0
      %1566 = vmatpush1.msra.mxu0 %v1558
      %1567 = vmatprep.subr.mxu0 0.0
      %1568 = vmatpush1.msra.mxu0 %v1557
      %1569 = vmatprep.subr.mxu0 0.0
      %1570 = vmatpush1.msra.mxu0 %v1556
      %1571 = vmatprep.subr.mxu0 0.0
      %1572 = vmatpush1.msra.mxu0 %v1555
      %1573 = vmatprep.subr.mxu0 0.0
      %1574 = vmatpush1.msra.mxu0 %v1554
      %1575 = vmatprep.subr.mxu0 0.0
      %1576 = vmatpush1.msra.mxu0 %v1553
      %1577 = vmatprep.subr.mxu0 0.0
      %1578 = vmatpush1.msra.mxu0 %v1552
      %1579 = vmatprep.subr.mxu0 0.0
      %1580 = vmatpush1.msra.mxu0 %v1551
      %1581 = vmatprep.subr.mxu0 0.0
      %1582 = vmatpush1.msra.mxu0 %v1550
      %1583 = vmatprep.subr.mxu0 0.0
      %1584 = vmatpush1.msra.mxu0 %v1549
      %1585 = vmatprep.subr.mxu0 0.0
      %1586 = vmatpush1.msra.mxu0 %v1548
      %1587 = vmatprep.subr.mxu0 0.0
      %1588 = vmatpush1.msra.mxu0 %v1547
      %1589 = vmatprep.subr.mxu0 0.0
      %1590 = vmatpush1.msra.mxu0 %v1546
      %1591 = vmatprep.subr.mxu0 0.0
      %1592 = vmatpush1.msra.mxu0 %v1545
      %1593 = vmatprep.subr.mxu0 0.0
      %1594 = vmatpush2.msra.mxu0 0.0
      %1595 = vmatprep.subr.mxu0 0.0
      %1596 = vmatpush2.msra.mxu0 0.0
      %1597 = vmatprep.subr.mxu0 0.0
      %1598 = vmatpush2.msra.mxu0 0.0
      %1599 = vmatprep.subr.mxu0 0.0
      %1600 = vmatpush2.msra.mxu0 0.0
      %1601 = vmatprep.subr.mxu0 0.0
      %1602 = vmatpush2.msra.mxu0 0.0
      %1603 = vmatprep.subr.mxu0 0.0
      %1604 = vmatpush2.msra.mxu0 0.0
      %1605 = vmatprep.subr.mxu0 0.0
      %1606 = vmatpush2.msra.mxu0 0.0
      %1607 = vmatprep.subr.mxu0 0.0
      %1608 = vmatpush2.msra.mxu0 0.0
      %1609 = vmatprep.subr.mxu0 0.0
      %1610 = vmatpush2.msra.mxu0 0.0
      %1611 = vmatprep.subr.mxu0 0.0
      %1612 = vmatpush2.msra.mxu0 0.0
      %1613 = vmatprep.subr.mxu0 0.0
      %1614 = vmatpush2.msra.mxu0 0.0
      %1615 = vmatprep.subr.mxu0 0.0
      %1616 = vmatpush2.msra.mxu0 0.0
      %1617 = vmatprep.subr.mxu0 0.0
      %1618 = vmatpush2.msra.mxu0 0.0
      %1619 = vmatprep.subr.mxu0 0.0
      %1620 = vmatpush2.msra.mxu0 0.0
      %1621 = vmatprep.subr.mxu0 0.0
      %1622 = vmatpush2.msra.mxu0 0.0
      %1623 = vmatprep.subr.mxu0 0.0
      %1624 = vmatpush2.msra.mxu0 0.0
      %1625 = vmatprep.mubr.f32.mxu0 0.0
      %1626 = vmatmul.mubr.f32.gmra.mxu0 %v1528
      %v1627 = vpop.f32.mrf.mxu0
      %v1628 = vadd.f32 0.0, %v1627
      %v1629 = vpop.f32.mrf.mxu0
      %1630 = vmatprep.mubr.f32.mxu0 0.0
      %1631 = vmatmul.mubr.f32.gmra.mxu0 %v1529
      %v1632 = vpop.f32.mrf.mxu0
      %v1633 = vadd.f32 0.0, %v1632
      %v1634 = vpop.f32.mrf.mxu0
      %1635 = vmatprep.mubr.f32.mxu0 0.0
      %1636 = vmatmul.mubr.f32.gmra.mxu0 %v1530
      %v1637 = vpop.f32.mrf.mxu0
      %v1638 = vadd.f32 0.0, %v1637
      %v1639 = vpop.f32.mrf.mxu0
      %1640 = vmatprep.mubr.f32.mxu0 0.0
      %1641 = vmatmul.mubr.f32.gmra.mxu0 %v1531
      %v1642 = vpop.f32.mrf.mxu0
      %v1643 = vadd.f32 0.0, %v1642
      %v1644 = vpop.f32.mrf.mxu0
      %1645 = vmatprep.mubr.f32.mxu0 0.0
      %1646 = vmatmul.mubr.f32.gmra.mxu0 %v1532
      %v1647 = vpop.f32.mrf.mxu0
      %v1648 = vadd.f32 0.0, %v1647
      %v1649 = vpop.f32.mrf.mxu0
      %1650 = vmatprep.mubr.f32.mxu0 0.0
      %1651 = vmatmul.mubr.f32.gmra.mxu0 %v1533
      %v1652 = vpop.f32.mrf.mxu0
      %v1653 = vadd.f32 0.0, %v1652
      %v1654 = vpop.f32.mrf.mxu0
      %1655 = vmatprep.mubr.f32.mxu0 0.0
      %1656 = vmatmul.mubr.f32.gmra.mxu0 %v1534
      %v1657 = vpop.f32.mrf.mxu0
      %v1658 = vadd.f32 0.0, %v1657
      %v1659 = vpop.f32.mrf.mxu0
      %1660 = vmatprep.mubr.f32.mxu0 0.0
      %1661 = vmatmul.mubr.f32.gmra.mxu0 %v1535
      %v1662 = vpop.f32.mrf.mxu0
      %v1663 = vadd.f32 0.0, %v1662
      %v1664 = vpop.f32.mrf.mxu0
      %1665 = vmatprep.mubr.f32.mxu0 0.0
      %1666 = vmatmul.mubr.f32.gmra.mxu0 %v1536
      %v1667 = vpop.f32.mrf.mxu0
      %v1668 = vadd.f32 0.0, %v1667
      %v1669 = vpop.f32.mrf.mxu0
      %1670 = vmatprep.mubr.f32.mxu0 0.0
      %1671 = vmatmul.mubr.f32.gmra.mxu0 %v1537
      %v1672 = vpop.f32.mrf.mxu0
      %v1673 = vadd.f32 0.0, %v1672
      %v1674 = vpop.f32.mrf.mxu0
      %1675 = vmatprep.mubr.f32.mxu0 0.0
      %1676 = vmatmul.mubr.f32.gmra.mxu0 %v1538
      %v1677 = vpop.f32.mrf.mxu0
      %v1678 = vadd.f32 0.0, %v1677
      %v1679 = vpop.f32.mrf.mxu0
      %1680 = vmatprep.mubr.f32.mxu0 0.0
      %1681 = vmatmul.mubr.f32.gmra.mxu0 %v1539
      %v1682 = vpop.f32.mrf.mxu0
      %v1683 = vadd.f32 0.0, %v1682
      %v1684 = vpop.f32.mrf.mxu0
      %1685 = vmatprep.mubr.f32.mxu0 0.0
      %1686 = vmatmul.mubr.f32.gmra.mxu0 %v1540
      %v1687 = vpop.f32.mrf.mxu0
      %v1688 = vadd.f32 0.0, %v1687
      %v1689 = vpop.f32.mrf.mxu0
      %1690 = vmatprep.mubr.f32.mxu0 0.0
      %1691 = vmatmul.mubr.f32.gmra.mxu0 %v1541
      %v1692 = vpop.f32.mrf.mxu0
      %v1693 = vadd.f32 0.0, %v1692
      %v1694 = vpop.f32.mrf.mxu0
      %1695 = vmatprep.mubr.f32.mxu0 0.0
      %1696 = vmatmul.mubr.f32.gmra.mxu0 %v1542
      %v1697 = vpop.f32.mrf.mxu0
      %v1698 = vadd.f32 0.0, %v1697
      %v1699 = vpop.f32.mrf.mxu0
      %1700 = vmatprep.mubr.f32.mxu0 0.0
      %1701 = vmatmul.mubr.f32.gmra.mxu0 %v1543
      %v1702 = vpop.f32.mrf.mxu0
      %v1703 = vadd.f32 0.0, %v1702
      %v1704 = vpop.f32.mrf.mxu0
      %1705 = vdwg.mxu0
      %v1706 = vadd.f32 %v1512, %v1628
      %v1707 = vadd.f32 %v1513, %v1633
      %v1708 = vadd.f32 %v1514, %v1638
      %v1709 = vadd.f32 %v1515, %v1643
      %v1710 = vadd.f32 %v1516, %v1648
      %v1711 = vadd.f32 %v1517, %v1653
      %v1712 = vadd.f32 %v1518, %v1658
      %v1713 = vadd.f32 %v1519, %v1663
      %v1714 = vadd.f32 %v1520, %v1668
      %v1715 = vadd.f32 %v1521, %v1673
      %v1716 = vadd.f32 %v1522, %v1678
      %v1717 = vadd.f32 %v1523, %v1683
      %v1718 = vadd.f32 %v1524, %v1688
      %v1719 = vadd.f32 %v1525, %v1693
      %v1720 = vadd.f32 %v1526, %v1698
      %v1721 = vadd.f32 %v1527, %v1703
      %v1722 = vld [vmem:[%s1333 + $0x2] sm:$0xff]
      %v1723 = vld [vmem:[%s1333 + $0xa] sm:$0xff]
      %v1724 = vld [vmem:[%s1333 + $0x1a] sm:$0xff]
      %v1725 = vld [vmem:[%s1333 + $0x22] sm:$0xff]
      %v1726 = vld [vmem:[%s1333 + $0x32] sm:$0xff]
      %v1727 = vld [vmem:[%s1333 + $0x3a] sm:$0xff]
      %v1728 = vld [vmem:[%s1333 + $0x4a] sm:$0xff]
      %v1729 = vld [vmem:[%s1333 + $0x52] sm:$0xff]
      %v1730 = vld [vmem:[%s1333 + $0x62] sm:$0xff]
      %v1731 = vld [vmem:[%s1333 + $0x6a] sm:$0xff]
      %v1732 = vld [vmem:[%s1333 + $0x7a] sm:$0xff]
      %v1733 = vld [vmem:[%s1333 + $0x82] sm:$0xff]
      %v1734 = vld [vmem:[%s1333 + $0x92] sm:$0xff]
      %v1735 = vld [vmem:[%s1333 + $0x9a] sm:$0xff]
      %v1736 = vld [vmem:[%s1333 + $0xaa] sm:$0xff]
      %v1737 = vld [vmem:[%s1333 + $0xb2] sm:$0xff]
      %s1738 = scalar_lea.vmem %s1, 1024
      %v1739 = vld [vmem:[%s1738] sm:$0xff]
      %v1740 = vld [vmem:[%s1738 + $0x8] sm:$0xff]
      %v1741 = vld [vmem:[%s1738 + $0x10] sm:$0xff]
      %v1742 = vld [vmem:[%s1738 + $0x18] sm:$0xff]
      %v1743 = vld [vmem:[%s1738 + $0x20] sm:$0xff]
      %v1744 = vld [vmem:[%s1738 + $0x28] sm:$0xff]
      %v1745 = vld [vmem:[%s1738 + $0x30] sm:$0xff]
      %v1746 = vld [vmem:[%s1738 + $0x38] sm:$0xff]
      %v1747 = vld [vmem:[%s1738 + $0x40] sm:$0xff]
      %v1748 = vld [vmem:[%s1738 + $0x48] sm:$0xff]
      %v1749 = vld [vmem:[%s1738 + $0x50] sm:$0xff]
      %v1750 = vld [vmem:[%s1738 + $0x58] sm:$0xff]
      %v1751 = vld [vmem:[%s1738 + $0x60] sm:$0xff]
      %v1752 = vld [vmem:[%s1738 + $0x68] sm:$0xff]
      %v1753 = vld [vmem:[%s1738 + $0x70] sm:$0xff]
      %v1754 = vld [vmem:[%s1738 + $0x78] sm:$0xff]
      %1755 = vmatprep.subr.mxu0 0.0
      %1756 = vmatpush1.msra.mxu0 %v1754
      %1757 = vmatprep.subr.mxu0 0.0
      %1758 = vmatpush1.msra.mxu0 %v1753
      %1759 = vmatprep.subr.mxu0 0.0
      %1760 = vmatpush1.msra.mxu0 %v1752
      %1761 = vmatprep.subr.mxu0 0.0
      %1762 = vmatpush1.msra.mxu0 %v1751
      %1763 = vmatprep.subr.mxu0 0.0
      %1764 = vmatpush1.msra.mxu0 %v1750
      %1765 = vmatprep.subr.mxu0 0.0
      %1766 = vmatpush1.msra.mxu0 %v1749
      %1767 = vmatprep.subr.mxu0 0.0
      %1768 = vmatpush1.msra.mxu0 %v1748
      %1769 = vmatprep.subr.mxu0 0.0
      %1770 = vmatpush1.msra.mxu0 %v1747
      %1771 = vmatprep.subr.mxu0 0.0
      %1772 = vmatpush1.msra.mxu0 %v1746
      %1773 = vmatprep.subr.mxu0 0.0
      %1774 = vmatpush1.msra.mxu0 %v1745
      %1775 = vmatprep.subr.mxu0 0.0
      %1776 = vmatpush1.msra.mxu0 %v1744
      %1777 = vmatprep.subr.mxu0 0.0
      %1778 = vmatpush1.msra.mxu0 %v1743
      %1779 = vmatprep.subr.mxu0 0.0
      %1780 = vmatpush1.msra.mxu0 %v1742
      %1781 = vmatprep.subr.mxu0 0.0
      %1782 = vmatpush1.msra.mxu0 %v1741
      %1783 = vmatprep.subr.mxu0 0.0
      %1784 = vmatpush1.msra.mxu0 %v1740
      %1785 = vmatprep.subr.mxu0 0.0
      %1786 = vmatpush1.msra.mxu0 %v1739
      %1787 = vmatprep.subr.mxu0 0.0
      %1788 = vmatpush2.msra.mxu0 0.0
      %1789 = vmatprep.subr.mxu0 0.0
      %1790 = vmatpush2.msra.mxu0 0.0
      %1791 = vmatprep.subr.mxu0 0.0
      %1792 = vmatpush2.msra.mxu0 0.0
      %1793 = vmatprep.subr.mxu0 0.0
      %1794 = vmatpush2.msra.mxu0 0.0
      %1795 = vmatprep.subr.mxu0 0.0
      %1796 = vmatpush2.msra.mxu0 0.0
      %1797 = vmatprep.subr.mxu0 0.0
      %1798 = vmatpush2.msra.mxu0 0.0
      %1799 = vmatprep.subr.mxu0 0.0
      %1800 = vmatpush2.msra.mxu0 0.0
      %1801 = vmatprep.subr.mxu0 0.0
      %1802 = vmatpush2.msra.mxu0 0.0
      %1803 = vmatprep.subr.mxu0 0.0
      %1804 = vmatpush2.msra.mxu0 0.0
      %1805 = vmatprep.subr.mxu0 0.0
      %1806 = vmatpush2.msra.mxu0 0.0
      %1807 = vmatprep.subr.mxu0 0.0
      %1808 = vmatpush2.msra.mxu0 0.0
      %1809 = vmatprep.subr.mxu0 0.0
      %1810 = vmatpush2.msra.mxu0 0.0
      %1811 = vmatprep.subr.mxu0 0.0
      %1812 = vmatpush2.msra.mxu0 0.0
      %1813 = vmatprep.subr.mxu0 0.0
      %1814 = vmatpush2.msra.mxu0 0.0
      %1815 = vmatprep.subr.mxu0 0.0
      %1816 = vmatpush2.msra.mxu0 0.0
      %1817 = vmatprep.subr.mxu0 0.0
      %1818 = vmatpush2.msra.mxu0 0.0
      %1819 = vmatprep.mubr.f32.mxu0 0.0
      %1820 = vmatmul.mubr.f32.gmra.mxu0 %v1722
      %v1821 = vpop.f32.mrf.mxu0
      %v1822 = vadd.f32 0.0, %v1821
      %v1823 = vpop.f32.mrf.mxu0
      %1824 = vmatprep.mubr.f32.mxu0 0.0
      %1825 = vmatmul.mubr.f32.gmra.mxu0 %v1723
      %v1826 = vpop.f32.mrf.mxu0
      %v1827 = vadd.f32 0.0, %v1826
      %v1828 = vpop.f32.mrf.mxu0
      %1829 = vmatprep.mubr.f32.mxu0 0.0
      %1830 = vmatmul.mubr.f32.gmra.mxu0 %v1724
      %v1831 = vpop.f32.mrf.mxu0
      %v1832 = vadd.f32 0.0, %v1831
      %v1833 = vpop.f32.mrf.mxu0
      %1834 = vmatprep.mubr.f32.mxu0 0.0
      %1835 = vmatmul.mubr.f32.gmra.mxu0 %v1725
      %v1836 = vpop.f32.mrf.mxu0
      %v1837 = vadd.f32 0.0, %v1836
      %v1838 = vpop.f32.mrf.mxu0
      %1839 = vmatprep.mubr.f32.mxu0 0.0
      %1840 = vmatmul.mubr.f32.gmra.mxu0 %v1726
      %v1841 = vpop.f32.mrf.mxu0
      %v1842 = vadd.f32 0.0, %v1841
      %v1843 = vpop.f32.mrf.mxu0
      %1844 = vmatprep.mubr.f32.mxu0 0.0
      %1845 = vmatmul.mubr.f32.gmra.mxu0 %v1727
      %v1846 = vpop.f32.mrf.mxu0
      %v1847 = vadd.f32 0.0, %v1846
      %v1848 = vpop.f32.mrf.mxu0
      %1849 = vmatprep.mubr.f32.mxu0 0.0
      %1850 = vmatmul.mubr.f32.gmra.mxu0 %v1728
      %v1851 = vpop.f32.mrf.mxu0
      %v1852 = vadd.f32 0.0, %v1851
      %v1853 = vpop.f32.mrf.mxu0
      %1854 = vmatprep.mubr.f32.mxu0 0.0
      %1855 = vmatmul.mubr.f32.gmra.mxu0 %v1729
      %v1856 = vpop.f32.mrf.mxu0
      %v1857 = vadd.f32 0.0, %v1856
      %v1858 = vpop.f32.mrf.mxu0
      %1859 = vmatprep.mubr.f32.mxu0 0.0
      %1860 = vmatmul.mubr.f32.gmra.mxu0 %v1730
      %v1861 = vpop.f32.mrf.mxu0
      %v1862 = vadd.f32 0.0, %v1861
      %v1863 = vpop.f32.mrf.mxu0
      %1864 = vmatprep.mubr.f32.mxu0 0.0
      %1865 = vmatmul.mubr.f32.gmra.mxu0 %v1731
      %v1866 = vpop.f32.mrf.mxu0
      %v1867 = vadd.f32 0.0, %v1866
      %v1868 = vpop.f32.mrf.mxu0
      %1869 = vmatprep.mubr.f32.mxu0 0.0
      %1870 = vmatmul.mubr.f32.gmra.mxu0 %v1732
      %v1871 = vpop.f32.mrf.mxu0
      %v1872 = vadd.f32 0.0, %v1871
      %v1873 = vpop.f32.mrf.mxu0
      %1874 = vmatprep.mubr.f32.mxu0 0.0
      %1875 = vmatmul.mubr.f32.gmra.mxu0 %v1733
      %v1876 = vpop.f32.mrf.mxu0
      %v1877 = vadd.f32 0.0, %v1876
      %v1878 = vpop.f32.mrf.mxu0
      %1879 = vmatprep.mubr.f32.mxu0 0.0
      %1880 = vmatmul.mubr.f32.gmra.mxu0 %v1734
      %v1881 = vpop.f32.mrf.mxu0
      %v1882 = vadd.f32 0.0, %v1881
      %v1883 = vpop.f32.mrf.mxu0
      %1884 = vmatprep.mubr.f32.mxu0 0.0
      %1885 = vmatmul.mubr.f32.gmra.mxu0 %v1735
      %v1886 = vpop.f32.mrf.mxu0
      %v1887 = vadd.f32 0.0, %v1886
      %v1888 = vpop.f32.mrf.mxu0
      %1889 = vmatprep.mubr.f32.mxu0 0.0
      %1890 = vmatmul.mubr.f32.gmra.mxu0 %v1736
      %v1891 = vpop.f32.mrf.mxu0
      %v1892 = vadd.f32 0.0, %v1891
      %v1893 = vpop.f32.mrf.mxu0
      %1894 = vmatprep.mubr.f32.mxu0 0.0
      %1895 = vmatmul.mubr.f32.gmra.mxu0 %v1737
      %v1896 = vpop.f32.mrf.mxu0
      %v1897 = vadd.f32 0.0, %v1896
      %v1898 = vpop.f32.mrf.mxu0
      %1899 = vdwg.mxu0
      %v1900 = vadd.f32 %v1706, %v1822
      %v1901 = vadd.f32 %v1707, %v1827
      %v1902 = vadd.f32 %v1708, %v1832
      %v1903 = vadd.f32 %v1709, %v1837
      %v1904 = vadd.f32 %v1710, %v1842
      %v1905 = vadd.f32 %v1711, %v1847
      %v1906 = vadd.f32 %v1712, %v1852
      %v1907 = vadd.f32 %v1713, %v1857
      %v1908 = vadd.f32 %v1714, %v1862
      %v1909 = vadd.f32 %v1715, %v1867
      %v1910 = vadd.f32 %v1716, %v1872
      %v1911 = vadd.f32 %v1717, %v1877
      %v1912 = vadd.f32 %v1718, %v1882
      %v1913 = vadd.f32 %v1719, %v1887
      %v1914 = vadd.f32 %v1720, %v1892
      %v1915 = vadd.f32 %v1721, %v1897
      %v1916 = vld [vmem:[%s2] sm:$0x1]
      %v1918 = vlaneseq
      %v1919 = vshrl.u32 %v1918, 7
      %v1920 = vsub.s32 0, %v1919
      %v1921 = vrot.slane %v1916, %v1920
      %v1923 = vadd.f32 %v1900, %v1921
      %v1924 = vadd.f32 %v1901, %v1921
      %v1925 = vadd.f32 %v1902, %v1921
      %v1926 = vadd.f32 %v1903, %v1921
      %v1927 = vadd.f32 %v1904, %v1921
      %v1928 = vadd.f32 %v1905, %v1921
      %v1929 = vadd.f32 %v1906, %v1921
      %v1930 = vadd.f32 %v1907, %v1921
      %v1931 = vadd.f32 %v1908, %v1921
      %v1932 = vadd.f32 %v1909, %v1921
      %v1933 = vadd.f32 %v1910, %v1921
      %v1934 = vadd.f32 %v1911, %v1921
      %v1935 = vadd.f32 %v1912, %v1921
      %v1936 = vadd.f32 %v1913, %v1921
      %v1937 = vadd.f32 %v1914, %v1921
      %v1938 = vadd.f32 %v1915, %v1921
      %vm1939 = vcmp.ge.f32.partialorder %v1923, 0.0
      %vm1940 = vcmp.ge.f32.partialorder %v1924, 0.0
      %vm1941 = vcmp.ge.f32.partialorder %v1925, 0.0
      %vm1942 = vcmp.ge.f32.partialorder %v1926, 0.0
      %vm1943 = vcmp.ge.f32.partialorder %v1927, 0.0
      %vm1944 = vcmp.ge.f32.partialorder %v1928, 0.0
      %vm1945 = vcmp.ge.f32.partialorder %v1929, 0.0
      %vm1946 = vcmp.ge.f32.partialorder %v1930, 0.0
      %vm1947 = vcmp.ge.f32.partialorder %v1931, 0.0
      %vm1948 = vcmp.ge.f32.partialorder %v1932, 0.0
      %vm1949 = vcmp.ge.f32.partialorder %v1933, 0.0
      %vm1950 = vcmp.ge.f32.partialorder %v1934, 0.0
      %vm1951 = vcmp.ge.f32.partialorder %v1935, 0.0
      %vm1952 = vcmp.ge.f32.partialorder %v1936, 0.0
      %vm1953 = vcmp.ge.f32.partialorder %v1937, 0.0
      %vm1954 = vcmp.ge.f32.partialorder %v1938, 0.0
      %v1955 = vmul.f32 %v1923, 0.01
      %v1956 = vmul.f32 %v1924, 0.01
      %v1957 = vmul.f32 %v1925, 0.01
      %v1958 = vmul.f32 %v1926, 0.01
      %v1959 = vmul.f32 %v1927, 0.01
      %v1960 = vmul.f32 %v1928, 0.01
      %v1961 = vmul.f32 %v1929, 0.01
      %v1962 = vmul.f32 %v1930, 0.01
      %v1963 = vmul.f32 %v1931, 0.01
      %v1964 = vmul.f32 %v1932, 0.01
      %v1965 = vmul.f32 %v1933, 0.01
      %v1966 = vmul.f32 %v1934, 0.01
      %v1967 = vmul.f32 %v1935, 0.01
      %v1968 = vmul.f32 %v1936, 0.01
      %v1969 = vmul.f32 %v1937, 0.01
      %v1970 = vmul.f32 %v1938, 0.01
      %v1971 = vsel %vm1939, %v1923, %v1955
      %v1972 = vsel %vm1940, %v1924, %v1956
      %v1973 = vsel %vm1941, %v1925, %v1957
      %v1974 = vsel %vm1942, %v1926, %v1958
      %v1975 = vsel %vm1943, %v1927, %v1959
      %v1976 = vsel %vm1944, %v1928, %v1960
      %v1977 = vsel %vm1945, %v1929, %v1961
      %v1978 = vsel %vm1946, %v1930, %v1962
      %v1979 = vsel %vm1947, %v1931, %v1963
      %v1980 = vsel %vm1948, %v1932, %v1964
      %v1981 = vsel %vm1949, %v1933, %v1965
      %v1982 = vsel %vm1950, %v1934, %v1966
      %v1983 = vsel %vm1951, %v1935, %v1967
      %v1984 = vsel %vm1952, %v1936, %v1968
      %v1985 = vsel %vm1953, %v1937, %v1969
      %v1986 = vsel %vm1954, %v1938, %v1970
      %1987 = vst [vmem:[%s192] sm:$0xff] %v1971
      %1988 = vst [vmem:[%s192 + $0x8] sm:$0xff] %v1972
      %1989 = vst [vmem:[%s192 + $0x10] sm:$0xff] %v1973
      %1990 = vst [vmem:[%s192 + $0x18] sm:$0xff] %v1974
      %1991 = vst [vmem:[%s192 + $0x20] sm:$0xff] %v1975
      %1992 = vst [vmem:[%s192 + $0x28] sm:$0xff] %v1976
      %1993 = vst [vmem:[%s192 + $0x30] sm:$0xff] %v1977
      %1994 = vst [vmem:[%s192 + $0x38] sm:$0xff] %v1978
      %1995 = vst [vmem:[%s192 + $0x40] sm:$0xff] %v1979
      %1996 = vst [vmem:[%s192 + $0x48] sm:$0xff] %v1980
      %1997 = vst [vmem:[%s192 + $0x50] sm:$0xff] %v1981
      %1998 = vst [vmem:[%s192 + $0x58] sm:$0xff] %v1982
      %1999 = vst [vmem:[%s192 + $0x60] sm:$0xff] %v1983
      %2000 = vst [vmem:[%s192 + $0x68] sm:$0xff] %v1984
      %2001 = vst [vmem:[%s192 + $0x70] sm:$0xff] %v1985
      %2002 = vst [vmem:[%s192 + $0x78] sm:$0xff] %v1986
      %s2003 = smul.u32 16, %s19
      %p2004 = scmp.lt.s32.totalorder %s18, 1
      %s2005 = scalar_select %p2004, %s18, 1
      %p2006 = scmp.lt.s32.totalorder %s2003, 31
      %s2007 = scalar_select %p2006, %s2003, 31
      %s2008 = smul.addr %s2005, 32
      %s2009 = sadd.s32 %s2007, %s2008
      %s2010 = smul.addr %s2009, 8
      %s2011 = scalar_lea.vmem %s3, %s2010
      // Predicated region
      $region33: #{stacked_conv_layers.2} parent=31 // pred_check
        %p2012 = pneg %p114
      $region34: #{stacked_conv_layers.2} parent=31 // pred_check_branch
        %2014 = sbr.rel (%p2012) target = $region36
      $region35: #{stacked_conv_layers.2} parent=31 // pred_region
        %s2015 = smul.u32 16, %s19
      $region36: #{stacked_conv_layers.2} parent=31 // pred_fallthru
        _
    $region32: #{stacked_conv_layers.2} parent=5 // pred_fallthru
      _
    %p2016 = scmp.le.s32.totalorder 2, %s9
    // Predicated region
    $region37: #{stacked_conv_layers.2} parent=5 // pred_check
      %p2017 = pneg %p2016
    $region38: #{stacked_conv_layers.2} parent=5 // pred_check_branch
      %2019 = sbr.rel (%p2017) target = $region40
    $region39: #{stacked_conv_layers.2} parent=5 // pred_region
      %s2020 = ssub.s32 %s9, 2
      // Predicated region
      $region41: #{stacked_conv_layers.2} parent=39 // pred_check
        %p2021 = pneg %p120
      $region42: #{stacked_conv_layers.2} parent=39 // pred_check_branch
        %2023 = sbr.rel (%p2021) target = $region44
      $region43: #{stacked_conv_layers.2} parent=39 // pred_region
        %s2024 = smul.u32 16, %s21
        %p2025 = scmp.lt.s32.totalorder %s20, 1
        %s2026 = scalar_select %p2025, %s20, 1
        %p2027 = scmp.lt.s32.totalorder %s2024, 31
        %s2028 = scalar_select %p2027, %s2024, 31
        %s2029 = smul.addr %s2026, 32
        %s2030 = sadd.s32 %s2028, %s2029
        %s2031 = smul.addr %s2030, 8
        %s2032 = scalar_lea.vmem %s3, %s2031
      $region44: #{stacked_conv_layers.2} parent=39 // pred_fallthru
        _
    $region40: #{stacked_conv_layers.2} parent=5 // pred_fallthru
      _
  $region6: #{stacked_conv_layers.2} parent=0 // loop_footer
    %s13 = sadd.s32 1, %s9
  $region7: #{stacked_conv_layers.2} parent=0 // loop_footer_branch
    %8 = sbr.rel target = $region3
  $region8: #{stacked_conv_layers.2} parent=0 // loop_exit
    _

</llo_original>
